<compile_context>
chip_gen: v7x
topology: tpu7x:2x2x1
jax: 0.10.0
libtpu: 0.0.40
codegen_flags: <defaults>
</compile_context>

<pallas_src>
import numpy as np
import jax
import jax.numpy as jnp
from jax.experimental import pallas as pl
from jax.experimental.pallas import tpu as pltpu


_VMEM_LIMIT = 32 * 1024 * 1024  # explicit scoped-VMEM budget (fits all gens)


def _leaky(v):
    return jnp.where(v >= 0.0, v, 0.1 * v)


def _plan_point_tiles(p, max_tile=1024):
    """Single full-size tile for small point counts; otherwise lane-aligned
    1024-row tiles with the point-index arrays padded (index -1, i.e. all-zero
    one-hot rows) up to a multiple of the tile."""
    if p <= max_tile:
        return p, p
    padded = -(-p // max_tile) * max_tile
    return max_tile, padded


# ----------------------------------------------------------------------------
# Fused kernel: downsample scatter_mean + layer_in + PPmodel (BN folded) +
# composed gather + layer_out + final scatter_mean, all in one pallas_call.
# ----------------------------------------------------------------------------
def fused_point_encoder_kernel(feat_ref, invr_ref, invc_ref, cinv_ref,
                               sinv_ref, in_w_ref, w1_ref, w2_ref, w3_ref,
                               w1a_ref, w1b_ref, w2x_ref, bias_ref,
                               o_ref, c_sc, cnt_sc):
    step = pl.program_id(0)
    N, Cin = feat_ref.shape
    Cout = o_ref.shape[1]
    Ch = w1_ref.shape[1]

    # --- per-voxel stage: runs once, result cached in VMEM (c_sc, bf16) -----
    @pl.when(step == 0)
    def _():
        feat = feat_ref[...]                                   # [N, Cin]  f32

        # downsample pooling: scatter_mean(features, inv) as a one-hot matmul
        seg = jax.lax.broadcasted_iota(jnp.int32, (N, N), 0)
        oh_pool = (seg == invr_ref[...]).astype(jnp.float32)   # [N_seg, N_pt]
        psum = jnp.dot(oh_pool, feat, preferred_element_type=jnp.float32)
        pcnt = jnp.maximum(jnp.sum(oh_pool, axis=1, keepdims=True), 1.0)
        pooled = psum * pl.reciprocal(pcnt, approx=True)       # [N, Cin]

        identity = _leaky(jnp.dot(feat, in_w_ref[...],
                                  preferred_element_type=jnp.float32)
                          + bias_ref[0:1, :])
        h = _leaky(jnp.dot(pooled, w1_ref[...],
                           preferred_element_type=jnp.float32)
                   + bias_ref[1:2, :Ch])
        h = _leaky(jnp.dot(h, w2_ref[...],
                           preferred_element_type=jnp.float32)
                   + bias_ref[2:3, :Ch])
        pp = _leaky(jnp.dot(h, w3_ref[...],
                            preferred_element_type=jnp.float32)
                    + bias_ref[3:4, :])

        # Compose the two per-point gathers into one:
        #   c[n] = identity[n] @ W1a + (pp @ W1b)[inv[n]] + lo_b1
        # so the per-tile stage is a single gather of c by coors_inv.
        a = jnp.dot(identity, w1a_ref[...], preferred_element_type=jnp.float32)
        b = jnp.dot(pp, w1b_ref[...], preferred_element_type=jnp.float32)
        lane_m = jax.lax.broadcasted_iota(jnp.int32, (N, N), 1)
        oh_g = (lane_m == invc_ref[...]).astype(jnp.float32)   # pp[inv] gather
        b_g = jnp.dot(oh_g, b, preferred_element_type=jnp.float32)
        c_sc[:, :Cout] = (a + b_g + bias_ref[4:5, :]).astype(jnp.bfloat16)
        # Extra constant-1 column: threaded through the bordered lo_w2 it
        # yields per-voxel counts from the scatter matmul for free.
        c_sc[:, Cout:Cout + 1] = jnp.ones((N, 1), jnp.bfloat16)

        cnt_sc[...] = jnp.zeros_like(cnt_sc)
        o_ref[...] = jnp.zeros_like(o_ref)

    # --- per-point stage (every grid step, tile of Tp points) ---------------
    Tp = cinv_ref.shape[0]
    lane_n = jax.lax.broadcasted_iota(jnp.int32, (Tp, N), 1)
    oh_c = (lane_n == cinv_ref[...]).astype(jnp.bfloat16)      # [Tp, N] bf16
    pre = jnp.dot(oh_c, c_sc[...],
                  preferred_element_type=jnp.float32)          # gather (+lo_b1)
    # bordered lo_w2 ([[W2,0],[0,1]]): column Cout carries the validity/count
    lo_ext = jnp.dot(_leaky(pre), w2x_ref[...],
                     preferred_element_type=jnp.float32)       # [Tp, Cout+1]

    # --- scatter-mean accumulation directly into the output block -----------
    V = o_ref.shape[0]
    seg_v = jax.lax.broadcasted_iota(jnp.int32, (V, Tp), 0)
    oh_s = (seg_v == sinv_ref[...]).astype(jnp.bfloat16)       # [V, Tp] bf16
    res = jnp.dot(oh_s, lo_ext.astype(jnp.bfloat16),
                  preferred_element_type=jnp.float32)          # [V, Cout+1]
    o_ref[...] += res[:, :Cout]
    cnt_sc[...] += res[:, Cout:Cout + 1]

    @pl.when(step == pl.num_programs(0) - 1)
    def _():
        cnt = cnt_sc[...]
        mean = o_ref[...] * pl.reciprocal(jnp.maximum(cnt, 1.0), approx=True)
        # lo_b2 hoisted past the mean (mean(x)+b == mean(x+b)); masked so
        # empty voxels stay exactly 0 like torch_scatter.scatter_mean.
        o_ref[...] = mean + jnp.where(cnt > 0.5, bias_ref[5:6, :], 0.0)


def fused_point_encoder(features, inv, coors_inv, scale_inv, prep,
                        num_out_voxels):
    N, Cin = features.shape
    Cout = prep["in_w"].shape[1]
    Ch = prep["pp_w1"].shape[1]
    P = coors_inv.shape[0]
    Tp, Ppad = _plan_point_tiles(P)
    pad = Ppad - P

    inv_row = inv.astype(jnp.int32).reshape(1, N)
    inv_col = inv.astype(jnp.int32).reshape(N, 1)
    cinv = jnp.pad(coors_inv.astype(jnp.int32), (0, pad),
                   constant_values=-1).reshape(Ppad, 1)
    sinv = jnp.pad(scale_inv.astype(jnp.int32), (0, pad),
                   constant_values=-1).reshape(1, Ppad)

    const = lambda shape: pl.BlockSpec(shape, lambda i: (0, 0))

    return pl.pallas_call(
        fused_point_encoder_kernel,
        out_shape=jax.ShapeDtypeStruct((num_out_voxels, Cout), jnp.float32),
        grid=(Ppad // Tp,),
        in_specs=[
            const((N, Cin)),                             # features (resident)
            const((1, N)),                               # inv (row layout)
            const((N, 1)),                               # inv (col layout)
            pl.BlockSpec((Tp, 1), lambda i: (i, 0)),     # coors_inv tile
            pl.BlockSpec((1, Tp), lambda i: (0, i)),     # scale coors_inv tile
            const((Cin, Cout)),                          # in_w
            const((Cin, Ch)),                            # pp_w1
            const((Ch, Ch)),                             # pp_w2 (BN1 folded)
            const((Ch, Cout)),                           # pp_w3 (BN2 folded)
            const((Cout, Cout)),                         # lo_w1[:Cout]
            const((Cout, Cout)),                         # lo_w1[Cout:]
            const((Cout + 1, Cout + 1)),                 # bordered lo_w2
            const((8, Cout)),                            # stacked biases
        ],
        out_specs=pl.BlockSpec((num_out_voxels, Cout), lambda i: (0, 0)),
        scratch_shapes=[
            pltpu.VMEM((N, Cout + 1), jnp.bfloat16),       # c (+ ones column)
            pltpu.VMEM((num_out_voxels, 1), jnp.float32),  # voxel counts
        ],
        compiler_params=pltpu.CompilerParams(
            dimension_semantics=("arbitrary",),   # accumulator across P tiles
            vmem_limit_bytes=_VMEM_LIMIT),
    )(features, inv_row, inv_col, cinv, sinv,
      prep["in_w"], prep["pp_w1"], prep["pp_w2f"], prep["pp_w3f"],
      prep["lo_w1a"], prep["lo_w1b"], prep["lo_w2x"], prep["biases"])


# ----------------------------------------------------------------------------
# Glue: downsample indices (torch.unique(return_inverse) equivalent)
# ----------------------------------------------------------------------------
def downsample_inverse(coors, scale):
    # TODO(synk): torch.unique(return_inverse) has no Pallas equivalent;
    #             computed with jnp.unique (fixed size = num rows). The key
    #             hash assumes batch and coord//scale fit in 6 bits (< 64),
    #             which holds for this test data.
    batch = coors[:, 0].astype(jnp.int32)
    spatial = (coors[:, 1:].astype(jnp.int32)) // scale
    key = ((batch * 64 + spatial[:, 0]) * 64 + spatial[:, 1]) * 64 + spatial[:, 2]
    _, inv = jnp.unique(key, return_inverse=True, size=coors.shape[0],
                        fill_value=jnp.int32(2 ** 30))
    return inv.reshape(-1).astype(jnp.int32)


# ----------------------------------------------------------------------------
# point_encoder forward (Pallas path): exactly ONE pallas_call
# ----------------------------------------------------------------------------
def point_encoder_forward(features, coors, coors_inv, scale_coors_inv,
                          prep, scale, num_out_voxels):
    inv = downsample_inverse(coors, scale)
    return fused_point_encoder(features, inv, coors_inv, scale_coors_inv,
                               prep, num_out_voxels)


# ----------------------------------------------------------------------------
# Parameter prep: fold eval-mode BN, split lo_w1, border lo_w2, stack biases
# ----------------------------------------------------------------------------
def prepare_params(p):
    Cout = p["in_w"].shape[1]
    w2f = p["bn1_scale"][:, None] * p["pp_w2"]
    b2f = p["pp_b2"] + p["bn1_shift"] @ p["pp_w2"]
    w3f = p["bn2_scale"][:, None] * p["pp_w3"]
    b3f = p["pp_b3"] + p["bn2_shift"] @ p["pp_w3"]

    # Bordered lo_w2: block-diag([lo_w2, 1]) so the constant-1 column of c
    # passes straight through the layer_out matmul and becomes the count lane.
    w2x = jnp.zeros((Cout + 1, Cout + 1), jnp.float32)
    w2x = w2x.at[:Cout, :Cout].set(p["lo_w2"])
    w2x = w2x.at[Cout, Cout].set(1.0)

    def pad_row(v):   # assumes Ch <= Cout (holds for half = out_ch // 2)
        return jnp.pad(v, (0, Cout - v.shape[0]))[None, :]

    biases = jnp.concatenate([
        p["in_b"][None, :],            # row 0: layer_in bias
        pad_row(p["pp_b1"]),           # row 1: PPmodel linear-1 bias (padded)
        pad_row(b2f),                  # row 2: PPmodel linear-2 bias (BN1 folded)
        b3f[None, :],                  # row 3: PPmodel linear-3 bias (BN2 folded)
        p["lo_b1"][None, :],           # row 4: layer_out linear-1 bias (baked into c)
        p["lo_b2"][None, :],           # row 5: layer_out linear-2 bias (hoisted)
        jnp.zeros((2, Cout), jnp.float32)], axis=0)          # pad to 8 rows
    return dict(in_w=p["in_w"], pp_w1=p["pp_w1"], pp_w2f=w2f, pp_w3f=w3f,
                lo_w1a=p["lo_w1"][:Cout], lo_w1b=p["lo_w1"][Cout:],
                lo_w2x=w2x, biases=biases)


# ----------------------------------------------------------------------------
# Pure-JAX reference (uses the original, unfolded parameters)
# ----------------------------------------------------------------------------
def ref_scatter_mean(values, idx, num_segments):
    sums = jnp.zeros((num_segments, values.shape[1]), jnp.float32).at[idx].add(values)
    cnt = jnp.zeros((num_segments, 1), jnp.float32).at[idx].add(1.0)
    return sums / jnp.maximum(cnt, 1.0)


def ref_forward(features, coors, coors_inv, scale_coors_inv,
                params, scale, num_out_voxels):
    leaky = lambda v: jnp.where(v >= 0.0, v, 0.1 * v)
    N = features.shape[0]
    inv = downsample_inverse(coors, scale)
    pooled = ref_scatter_mean(features, inv, N)
    identity = leaky(features @ params["in_w"] + params["in_b"])
    h = leaky(pooled @ params["pp_w1"] + params["pp_b1"])
    h = h * params["bn1_scale"] + params["bn1_shift"]
    h = leaky(h @ params["pp_w2"] + params["pp_b2"])
    h = h * params["bn2_scale"] + params["bn2_shift"]
    pp = leaky(h @ params["pp_w3"] + params["pp_b3"])
    output = jnp.concatenate([identity, pp[inv]], axis=1)
    g = output[coors_inv]
    lo = leaky(g @ params["lo_w1"] + params["lo_b1"]) @ params["lo_w2"] + params["lo_b2"]
    return ref_scatter_mean(lo, scale_coors_inv, num_out_voxels)


# ----------------------------------------------------------------------------
# Parameter init (deterministic, PyTorch-style fan-in uniform)
# ----------------------------------------------------------------------------
def init_params(key, in_ch, out_ch):
    def lin(k, fi, fo):
        kw, kb = jax.random.split(k)
        bound = 1.0 / np.sqrt(fi)
        return (jax.random.uniform(kw, (fi, fo), jnp.float32, -bound, bound),
                jax.random.uniform(kb, (fo,), jnp.float32, -bound, bound))

    half = out_ch // 2
    ks = jax.random.split(key, 10)
    p = {}
    p["in_w"], p["in_b"] = lin(ks[0], in_ch, out_ch)
    p["pp_w1"], p["pp_b1"] = lin(ks[1], in_ch, half)
    p["pp_w2"], p["pp_b2"] = lin(ks[2], half, half)
    p["pp_w3"], p["pp_b3"] = lin(ks[3], half, out_ch)
    p["lo_w1"], p["lo_b1"] = lin(ks[4], 2 * out_ch, out_ch)
    p["lo_w2"], p["lo_b2"] = lin(ks[5], out_ch, out_ch)
    # BatchNorm1d in eval mode, folded to per-channel scale/shift.
    # TODO(synk): training-mode BN (batch statistics + running-stat update) not modeled.
    eps = 1e-5
    for i, kk in zip((1, 2), (ks[6], ks[7])):
        k1, k2, k3, k4 = jax.random.split(kk, 4)
        gamma = 1.0 + 0.1 * jax.random.uniform(k1, (half,), jnp.float32)
        beta = 0.1 * jax.random.uniform(k2, (half,), jnp.float32, -1.0, 1.0)
        rmean = 0.05 * jax.random.normal(k3, (half,), jnp.float32)
        rvar = 1.0 + 0.1 * jax.random.uniform(k4, (half,), jnp.float32)
        scale = gamma / jnp.sqrt(rvar + eps)
        p[f"bn{i}_scale"] = scale
        p[f"bn{i}_shift"] = beta - rmean * scale
    return p


# ----------------------------------------------------------------------------
if __name__ == "__main__":
    key = jax.random.PRNGKey(0)
    k_feat, k_coor, k_batch, k_cinv, k_sinv, k_par = jax.random.split(key, 6)

    IN_CH, OUT_CH, SCALE = 16, 32, 2
    N = 96     # voxels at the current scale (rows of `features` / `coors`)
    P = 128    # full point count (length of coors_inv arrays)
    V = 40     # voxels at the next scale (scale_2)

    features = jax.random.normal(k_feat, (N, IN_CH), jnp.float32)
    coors = jnp.concatenate(
        [jax.random.randint(k_batch, (N, 1), 0, 2),
         jax.random.randint(k_coor, (N, 3), 0, 16)], axis=1).astype(jnp.int32)
    coors_inv = jax.random.randint(k_cinv, (P,), 0, N, jnp.int32)
    scale2_coors_inv = jax.random.randint(k_sinv, (P,), 0, V, jnp.int32)

    params = init_params(k_par, IN_CH, OUT_CH)
    prep = prepare_params(params)

    v_feat = point_encoder_forward(features, coors, coors_inv,
                                   scale2_coors_inv, prep, SCALE, V)
    v_feat = jax.block_until_ready(v_feat)

    v_ref = ref_forward(features, coors, coors_inv, scale2_coors_inv,
                        params, SCALE, V)
    np.testing.assert_allclose(np.asarray(v_feat), np.asarray(v_ref),
                               rtol=2e-2, atol=2e-2)
    print("KERNEL_OK")
</pallas_src>

<mosaic_0001>
module attributes {stable_mosaic.version = 11 : i64} {
  func.func @fused_point_encoder_kernel(%arg0: i32, %arg1: memref<96x16xf32, #tpu.memory_space<vmem>>, %arg2: memref<1x96xi32, #tpu.memory_space<vmem>>, %arg3: memref<96x1xi32, #tpu.memory_space<vmem>>, %arg4: memref<128x1xi32, #tpu.memory_space<vmem>>, %arg5: memref<1x128xi32, #tpu.memory_space<vmem>>, %arg6: memref<16x32xf32, #tpu.memory_space<vmem>>, %arg7: memref<16x16xf32, #tpu.memory_space<vmem>>, %arg8: memref<16x16xf32, #tpu.memory_space<vmem>>, %arg9: memref<16x32xf32, #tpu.memory_space<vmem>>, %arg10: memref<32x32xf32, #tpu.memory_space<vmem>>, %arg11: memref<32x32xf32, #tpu.memory_space<vmem>>, %arg12: memref<33x33xf32, #tpu.memory_space<vmem>>, %arg13: memref<8x32xf32, #tpu.memory_space<vmem>>, %arg14: memref<40x32xf32, #tpu.memory_space<vmem>>, %arg15: memref<96x33xbf16, #tpu.memory_space<vmem>>, %arg16: memref<40x1xf32, #tpu.memory_space<vmem>>) attributes {dimension_semantics = [#tpu.dimension_semantics<arbitrary>], iteration_bounds = array<i64: 1>, scalar_prefetch = 0 : i64, scratch_operands = 2 : i64, tpu.core_type = #tpu.core_type<tc>, window_params = [{pipeline_mode = #tpu.pipeline_mode<synchronous>, transform_indices = @transform_0, window_bounds = array<i64: 96, 16>}, {pipeline_mode = #tpu.pipeline_mode<synchronous>, transform_indices = @transform_1, window_bounds = array<i64: 1, 96>}, {pipeline_mode = #tpu.pipeline_mode<synchronous>, transform_indices = @transform_2, window_bounds = array<i64: 96, 1>}, {transform_indices = @transform_3, window_bounds = array<i64: 128, 1>}, {transform_indices = @transform_4, window_bounds = array<i64: 1, 128>}, {pipeline_mode = #tpu.pipeline_mode<synchronous>, transform_indices = @transform_5, window_bounds = array<i64: 16, 32>}, {pipeline_mode = #tpu.pipeline_mode<synchronous>, transform_indices = @transform_6, window_bounds = array<i64: 16, 16>}, {pipeline_mode = #tpu.pipeline_mode<synchronous>, transform_indices = @transform_7, window_bounds = array<i64: 16, 16>}, {pipeline_mode = #tpu.pipeline_mode<synchronous>, transform_indices = @transform_8, window_bounds = array<i64: 16, 32>}, {pipeline_mode = #tpu.pipeline_mode<synchronous>, transform_indices = @transform_9, window_bounds = array<i64: 32, 32>}, {pipeline_mode = #tpu.pipeline_mode<synchronous>, transform_indices = @transform_10, window_bounds = array<i64: 32, 32>}, {pipeline_mode = #tpu.pipeline_mode<synchronous>, transform_indices = @transform_11, window_bounds = array<i64: 33, 33>}, {pipeline_mode = #tpu.pipeline_mode<synchronous>, transform_indices = @transform_12, window_bounds = array<i64: 8, 32>}, {pipeline_mode = #tpu.pipeline_mode<synchronous>, transform_indices = @transform_13, window_bounds = array<i64: 40, 32>}]} {
    %c0_i32 = arith.constant 0 : i32
    %0 = arith.cmpi eq, %arg0, %c0_i32 : i32
    %1 = arith.extui %0 : i1 to i32
    %c0_i32_0 = arith.constant 0 : i32
    %2 = arith.cmpi ne, %1, %c0_i32_0 : i32
    scf.if %2 {
      %c0_22 = arith.constant 0 : index
      %c0_23 = arith.constant 0 : index
      %39 = vector.load %arg1[%c0_22, %c0_23] : memref<96x16xf32, #tpu.memory_space<vmem>>, vector<96x16xf32>
      %40 = tpu.iota {dimensions = array<i32: 0>} : vector<96x96xi32>
      %c0_24 = arith.constant 0 : index
      %c0_25 = arith.constant 0 : index
      %41 = vector.load %arg2[%c0_24, %c0_25] : memref<1x96xi32, #tpu.memory_space<vmem>>, vector<1x96xi32>
      %42 = vector.broadcast %41 : vector<1x96xi32> to vector<96x96xi32>
      %43 = arith.cmpi eq, %40, %42 : vector<96x96xi32>
      %44 = arith.extui %43 : vector<96x96xi1> to vector<96x96xi32>
      %45 = arith.sitofp %44 : vector<96x96xi32> to vector<96x96xf32>
      %cst_26 = arith.constant dense<0.000000e+00> : vector<96x16xf32>
      %46 = tpu.matmul %45, %39, %cst_26 {dimension_numbers = #tpu.dot_dimension_numbers<[1], [0], [0], [1], [0, 0, 1, 1], [], []>} : vector<96x96xf32>, vector<96x16xf32>, vector<96x16xf32> -> vector<96x16xf32>
      %cst_27 = arith.constant dense<0.000000e+00> : vector<96xf32>
      %47 = vector.multi_reduction <add>, %45, %cst_27 [1] : vector<96x96xf32> to vector<96xf32>
      %48 = vector.shape_cast %47 : vector<96xf32> to vector<96x1xf32>
      %cst_28 = arith.constant 1.000000e+00 : f32
      %49 = vector.broadcast %cst_28 : f32 to vector<96x1xf32>
      %50 = arith.maximumf %48, %49 : vector<96x1xf32>
      %51 = tpu.reciprocal %50 {approx = true} : vector<96x1xf32> -> vector<96x1xf32>
      %52 = vector.broadcast %51 : vector<96x1xf32> to vector<96x16xf32>
      %53 = arith.mulf %46, %52 : vector<96x16xf32>
      %c0_29 = arith.constant 0 : index
      %c0_30 = arith.constant 0 : index
      %54 = vector.load %arg6[%c0_29, %c0_30] : memref<16x32xf32, #tpu.memory_space<vmem>>, vector<16x32xf32>
      %cst_31 = arith.constant dense<0.000000e+00> : vector<96x32xf32>
      %55 = tpu.matmul %39, %54, %cst_31 {dimension_numbers = #tpu.dot_dimension_numbers<[1], [0], [0], [1], [0, 0, 1, 1], [], []>} : vector<96x16xf32>, vector<16x32xf32>, vector<96x32xf32> -> vector<96x32xf32>
      %c0_32 = arith.constant 0 : index
      %c0_33 = arith.constant 0 : index
      %56 = vector.load %arg13[%c0_32, %c0_33] : memref<8x32xf32, #tpu.memory_space<vmem>>, vector<1x32xf32>
      %57 = vector.broadcast %56 : vector<1x32xf32> to vector<96x32xf32>
      %58 = arith.addf %55, %57 : vector<96x32xf32>
      %cst_34 = arith.constant 0.000000e+00 : f32
      %59 = vector.broadcast %cst_34 : f32 to vector<96x32xf32>
      %60 = arith.cmpf oge, %58, %59 : vector<96x32xf32>
      %cst_35 = arith.constant 1.000000e-01 : f32
      %61 = vector.broadcast %cst_35 : f32 to vector<96x32xf32>
      %62 = arith.mulf %61, %58 : vector<96x32xf32>
      %63 = arith.select %60, %58, %62 : vector<96x32xi1>, vector<96x32xf32>
      %c0_36 = arith.constant 0 : index
      %c0_37 = arith.constant 0 : index
      %64 = vector.load %arg7[%c0_36, %c0_37] : memref<16x16xf32, #tpu.memory_space<vmem>>, vector<16x16xf32>
      %cst_38 = arith.constant dense<0.000000e+00> : vector<96x16xf32>
      %65 = tpu.matmul %53, %64, %cst_38 {dimension_numbers = #tpu.dot_dimension_numbers<[1], [0], [0], [1], [0, 0, 1, 1], [], []>} : vector<96x16xf32>, vector<16x16xf32>, vector<96x16xf32> -> vector<96x16xf32>
      %c1 = arith.constant 1 : index
      %c0_39 = arith.constant 0 : index
      %66 = vector.load %arg13[%c1, %c0_39] : memref<8x32xf32, #tpu.memory_space<vmem>>, vector<1x16xf32>
      %67 = vector.broadcast %66 : vector<1x16xf32> to vector<96x16xf32>
      %68 = arith.addf %65, %67 : vector<96x16xf32>
      %cst_40 = arith.constant 0.000000e+00 : f32
      %69 = vector.broadcast %cst_40 : f32 to vector<96x16xf32>
      %70 = arith.cmpf oge, %68, %69 : vector<96x16xf32>
      %cst_41 = arith.constant 1.000000e-01 : f32
      %71 = vector.broadcast %cst_41 : f32 to vector<96x16xf32>
      %72 = arith.mulf %71, %68 : vector<96x16xf32>
      %73 = arith.select %70, %68, %72 : vector<96x16xi1>, vector<96x16xf32>
      %c0_42 = arith.constant 0 : index
      %c0_43 = arith.constant 0 : index
      %74 = vector.load %arg8[%c0_42, %c0_43] : memref<16x16xf32, #tpu.memory_space<vmem>>, vector<16x16xf32>
      %cst_44 = arith.constant dense<0.000000e+00> : vector<96x16xf32>
      %75 = tpu.matmul %73, %74, %cst_44 {dimension_numbers = #tpu.dot_dimension_numbers<[1], [0], [0], [1], [0, 0, 1, 1], [], []>} : vector<96x16xf32>, vector<16x16xf32>, vector<96x16xf32> -> vector<96x16xf32>
      %c2 = arith.constant 2 : index
      %c0_45 = arith.constant 0 : index
      %76 = vector.load %arg13[%c2, %c0_45] : memref<8x32xf32, #tpu.memory_space<vmem>>, vector<1x16xf32>
      %77 = vector.broadcast %76 : vector<1x16xf32> to vector<96x16xf32>
      %78 = arith.addf %75, %77 : vector<96x16xf32>
      %cst_46 = arith.constant 0.000000e+00 : f32
      %79 = vector.broadcast %cst_46 : f32 to vector<96x16xf32>
      %80 = arith.cmpf oge, %78, %79 : vector<96x16xf32>
      %cst_47 = arith.constant 1.000000e-01 : f32
      %81 = vector.broadcast %cst_47 : f32 to vector<96x16xf32>
      %82 = arith.mulf %81, %78 : vector<96x16xf32>
      %83 = arith.select %80, %78, %82 : vector<96x16xi1>, vector<96x16xf32>
      %c0_48 = arith.constant 0 : index
      %c0_49 = arith.constant 0 : index
      %84 = vector.load %arg9[%c0_48, %c0_49] : memref<16x32xf32, #tpu.memory_space<vmem>>, vector<16x32xf32>
      %cst_50 = arith.constant dense<0.000000e+00> : vector<96x32xf32>
      %85 = tpu.matmul %83, %84, %cst_50 {dimension_numbers = #tpu.dot_dimension_numbers<[1], [0], [0], [1], [0, 0, 1, 1], [], []>} : vector<96x16xf32>, vector<16x32xf32>, vector<96x32xf32> -> vector<96x32xf32>
      %c3 = arith.constant 3 : index
      %c0_51 = arith.constant 0 : index
      %86 = vector.load %arg13[%c3, %c0_51] : memref<8x32xf32, #tpu.memory_space<vmem>>, vector<1x32xf32>
      %87 = vector.broadcast %86 : vector<1x32xf32> to vector<96x32xf32>
      %88 = arith.addf %85, %87 : vector<96x32xf32>
      %cst_52 = arith.constant 0.000000e+00 : f32
      %89 = vector.broadcast %cst_52 : f32 to vector<96x32xf32>
      %90 = arith.cmpf oge, %88, %89 : vector<96x32xf32>
      %cst_53 = arith.constant 1.000000e-01 : f32
      %91 = vector.broadcast %cst_53 : f32 to vector<96x32xf32>
      %92 = arith.mulf %91, %88 : vector<96x32xf32>
      %93 = arith.select %90, %88, %92 : vector<96x32xi1>, vector<96x32xf32>
      %c0_54 = arith.constant 0 : index
      %c0_55 = arith.constant 0 : index
      %94 = vector.load %arg10[%c0_54, %c0_55] : memref<32x32xf32, #tpu.memory_space<vmem>>, vector<32x32xf32>
      %cst_56 = arith.constant dense<0.000000e+00> : vector<96x32xf32>
      %95 = tpu.matmul %63, %94, %cst_56 {dimension_numbers = #tpu.dot_dimension_numbers<[1], [0], [0], [1], [0, 0, 1, 1], [], []>} : vector<96x32xf32>, vector<32x32xf32>, vector<96x32xf32> -> vector<96x32xf32>
      %c0_57 = arith.constant 0 : index
      %c0_58 = arith.constant 0 : index
      %96 = vector.load %arg11[%c0_57, %c0_58] : memref<32x32xf32, #tpu.memory_space<vmem>>, vector<32x32xf32>
      %cst_59 = arith.constant dense<0.000000e+00> : vector<96x32xf32>
      %97 = tpu.matmul %93, %96, %cst_59 {dimension_numbers = #tpu.dot_dimension_numbers<[1], [0], [0], [1], [0, 0, 1, 1], [], []>} : vector<96x32xf32>, vector<32x32xf32>, vector<96x32xf32> -> vector<96x32xf32>
      %98 = tpu.iota {dimensions = array<i32: 1>} : vector<96x96xi32>
      %c0_60 = arith.constant 0 : index
      %c0_61 = arith.constant 0 : index
      %99 = vector.load %arg3[%c0_60, %c0_61] : memref<96x1xi32, #tpu.memory_space<vmem>>, vector<96x1xi32>
      %100 = vector.broadcast %99 : vector<96x1xi32> to vector<96x96xi32>
      %101 = arith.cmpi eq, %98, %100 : vector<96x96xi32>
      %102 = arith.extui %101 : vector<96x96xi1> to vector<96x96xi32>
      %103 = arith.sitofp %102 : vector<96x96xi32> to vector<96x96xf32>
      %cst_62 = arith.constant dense<0.000000e+00> : vector<96x32xf32>
      %104 = tpu.matmul %103, %97, %cst_62 {dimension_numbers = #tpu.dot_dimension_numbers<[1], [0], [0], [1], [0, 0, 1, 1], [], []>} : vector<96x96xf32>, vector<96x32xf32>, vector<96x32xf32> -> vector<96x32xf32>
      %105 = arith.addf %95, %104 : vector<96x32xf32>
      %c4 = arith.constant 4 : index
      %c0_63 = arith.constant 0 : index
      %106 = vector.load %arg13[%c4, %c0_63] : memref<8x32xf32, #tpu.memory_space<vmem>>, vector<1x32xf32>
      %107 = vector.broadcast %106 : vector<1x32xf32> to vector<96x32xf32>
      %108 = arith.addf %105, %107 : vector<96x32xf32>
      %109 = arith.truncf %108 : vector<96x32xf32> to vector<96x32xbf16>
      %c0_64 = arith.constant 0 : index
      %c0_65 = arith.constant 0 : index
      %110 = vector.load %arg15[%c0_64, %c0_65] : memref<96x33xbf16, #tpu.memory_space<vmem>>, vector<96x32xbf16>
      tpu.vector_store %arg15[%c0_64, %c0_65], %109 {strides = array<i32>} : memref<96x33xbf16, #tpu.memory_space<vmem>>, vector<96x32xbf16>,
      %cst_66 = arith.constant 1.000000e+00 : bf16
      %111 = vector.broadcast %cst_66 : bf16 to vector<96x1xbf16>
      %c0_67 = arith.constant 0 : index
      %c32 = arith.constant 32 : index
      %112 = vector.load %arg15[%c0_67, %c32] : memref<96x33xbf16, #tpu.memory_space<vmem>>, vector<96x1xbf16>
      tpu.vector_store %arg15[%c0_67, %c32], %111 {strides = array<i32>} : memref<96x33xbf16, #tpu.memory_space<vmem>>, vector<96x1xbf16>,
      %cst_68 = arith.constant 0.000000e+00 : f32
      %113 = vector.broadcast %cst_68 : f32 to vector<40x1xf32>
      %c0_69 = arith.constant 0 : index
      %c0_70 = arith.constant 0 : index
      %114 = vector.load %arg16[%c0_69, %c0_70] : memref<40x1xf32, #tpu.memory_space<vmem>>, vector<40x1xf32>
      tpu.vector_store %arg16[%c0_69, %c0_70], %113 {strides = array<i32>} : memref<40x1xf32, #tpu.memory_space<vmem>>, vector<40x1xf32>,
      %cst_71 = arith.constant 0.000000e+00 : f32
      %115 = vector.broadcast %cst_71 : f32 to vector<40x32xf32>
      %c0_72 = arith.constant 0 : index
      %c0_73 = arith.constant 0 : index
      %116 = vector.load %arg14[%c0_72, %c0_73] : memref<40x32xf32, #tpu.memory_space<vmem>>, vector<40x32xf32>
      tpu.vector_store %arg14[%c0_72, %c0_73], %115 {strides = array<i32>} : memref<40x32xf32, #tpu.memory_space<vmem>>, vector<40x32xf32>,
    } else {
    }
    %3 = tpu.iota {dimensions = array<i32: 1>} : vector<128x96xi32>
    %c0 = arith.constant 0 : index
    %c0_1 = arith.constant 0 : index
    %4 = vector.load %arg4[%c0, %c0_1] : memref<128x1xi32, #tpu.memory_space<vmem>>, vector<128x1xi32>
    %5 = vector.broadcast %4 : vector<128x1xi32> to vector<128x96xi32>
    %6 = arith.cmpi eq, %3, %5 : vector<128x96xi32>
    %7 = arith.extui %6 : vector<128x96xi1> to vector<128x96xi32>
    %8 = arith.sitofp %7 : vector<128x96xi32> to vector<128x96xf32>
    %9 = arith.truncf %8 : vector<128x96xf32> to vector<128x96xbf16>
    %c0_2 = arith.constant 0 : index
    %c0_3 = arith.constant 0 : index
    %10 = vector.load %arg15[%c0_2, %c0_3] : memref<96x33xbf16, #tpu.memory_space<vmem>>, vector<96x33xbf16>
    %cst = arith.constant dense<0.000000e+00> : vector<128x33xf32>
    %11 = tpu.matmul %9, %10, %cst {dimension_numbers = #tpu.dot_dimension_numbers<[1], [0], [0], [1], [0, 0, 1, 1], [], []>} : vector<128x96xbf16>, vector<96x33xbf16>, vector<128x33xf32> -> vector<128x33xf32>
    %cst_4 = arith.constant 0.000000e+00 : f32
    %12 = vector.broadcast %cst_4 : f32 to vector<128x33xf32>
    %13 = arith.cmpf oge, %11, %12 : vector<128x33xf32>
    %cst_5 = arith.constant 1.000000e-01 : f32
    %14 = vector.broadcast %cst_5 : f32 to vector<128x33xf32>
    %15 = arith.mulf %14, %11 : vector<128x33xf32>
    %16 = arith.select %13, %11, %15 : vector<128x33xi1>, vector<128x33xf32>
    %c0_6 = arith.constant 0 : index
    %c0_7 = arith.constant 0 : index
    %17 = vector.load %arg12[%c0_6, %c0_7] : memref<33x33xf32, #tpu.memory_space<vmem>>, vector<33x33xf32>
    %cst_8 = arith.constant dense<0.000000e+00> : vector<128x33xf32>
    %18 = tpu.matmul %16, %17, %cst_8 {dimension_numbers = #tpu.dot_dimension_numbers<[1], [0], [0], [1], [0, 0, 1, 1], [], []>} : vector<128x33xf32>, vector<33x33xf32>, vector<128x33xf32> -> vector<128x33xf32>
    %19 = tpu.iota {dimensions = array<i32: 0>} : vector<40x128xi32>
    %c0_9 = arith.constant 0 : index
    %c0_10 = arith.constant 0 : index
    %20 = vector.load %arg5[%c0_9, %c0_10] : memref<1x128xi32, #tpu.memory_space<vmem>>, vector<1x128xi32>
    %21 = vector.broadcast %20 : vector<1x128xi32> to vector<40x128xi32>
    %22 = arith.cmpi eq, %19, %21 : vector<40x128xi32>
    %23 = arith.extui %22 : vector<40x128xi1> to vector<40x128xi32>
    %24 = arith.sitofp %23 : vector<40x128xi32> to vector<40x128xf32>
    %25 = arith.truncf %24 : vector<40x128xf32> to vector<40x128xbf16>
    %26 = arith.truncf %18 : vector<128x33xf32> to vector<128x33xbf16>
    %cst_11 = arith.constant dense<0.000000e+00> : vector<40x33xf32>
    %27 = tpu.matmul %25, %26, %cst_11 {dimension_numbers = #tpu.dot_dimension_numbers<[1], [0], [0], [1], [0, 0, 1, 1], [], []>} : vector<40x128xbf16>, vector<128x33xbf16>, vector<40x33xf32> -> vector<40x33xf32>
    %c0_12 = arith.constant 0 : index
    %c0_13 = arith.constant 0 : index
    %28 = vector.load %arg14[%c0_12, %c0_13] : memref<40x32xf32, #tpu.memory_space<vmem>>, vector<40x32xf32>
    %29 = vector.extract_strided_slice %27 {offsets = [0, 0], sizes = [40, 32], strides = [1, 1]} : vector<40x33xf32> to vector<40x32xf32>
    %30 = arith.addf %28, %29 : vector<40x32xf32>
    %c0_14 = arith.constant 0 : index
    %c0_15 = arith.constant 0 : index
    %31 = vector.load %arg14[%c0_14, %c0_15] : memref<40x32xf32, #tpu.memory_space<vmem>>, vector<40x32xf32>
    tpu.vector_store %arg14[%c0_14, %c0_15], %30 {strides = array<i32>} : memref<40x32xf32, #tpu.memory_space<vmem>>, vector<40x32xf32>,
    %c0_16 = arith.constant 0 : index
    %c0_17 = arith.constant 0 : index
    %32 = vector.load %arg16[%c0_16, %c0_17] : memref<40x1xf32, #tpu.memory_space<vmem>>, vector<40x1xf32>
    %33 = vector.extract_strided_slice %27 {offsets = [0, 32], sizes = [40, 1], strides = [1, 1]} : vector<40x33xf32> to vector<40x1xf32>
    %34 = arith.addf %32, %33 : vector<40x1xf32>
    %c0_18 = arith.constant 0 : index
    %c0_19 = arith.constant 0 : index
    %35 = vector.load %arg16[%c0_18, %c0_19] : memref<40x1xf32, #tpu.memory_space<vmem>>, vector<40x1xf32>
    tpu.vector_store %arg16[%c0_18, %c0_19], %34 {strides = array<i32>} : memref<40x1xf32, #tpu.memory_space<vmem>>, vector<40x1xf32>,
    %c0_i32_20 = arith.constant 0 : i32
    %36 = arith.cmpi eq, %arg0, %c0_i32_20 : i32
    %37 = arith.extui %36 : i1 to i32
    %c0_i32_21 = arith.constant 0 : i32
    %38 = arith.cmpi ne, %37, %c0_i32_21 : i32
    scf.if %38 {
      %c0_22 = arith.constant 0 : index
      %c0_23 = arith.constant 0 : index
      %39 = vector.load %arg16[%c0_22, %c0_23] : memref<40x1xf32, #tpu.memory_space<vmem>>, vector<40x1xf32>
      %c0_24 = arith.constant 0 : index
      %c0_25 = arith.constant 0 : index
      %40 = vector.load %arg14[%c0_24, %c0_25] : memref<40x32xf32, #tpu.memory_space<vmem>>, vector<40x32xf32>
      %cst_26 = arith.constant 1.000000e+00 : f32
      %41 = vector.broadcast %cst_26 : f32 to vector<40x1xf32>
      %42 = arith.maximumf %39, %41 : vector<40x1xf32>
      %43 = tpu.reciprocal %42 {approx = true} : vector<40x1xf32> -> vector<40x1xf32>
      %44 = vector.broadcast %43 : vector<40x1xf32> to vector<40x32xf32>
      %45 = arith.mulf %40, %44 : vector<40x32xf32>
      %cst_27 = arith.constant 5.000000e-01 : f32
      %46 = vector.broadcast %cst_27 : f32 to vector<40x1xf32>
      %47 = arith.cmpf ogt, %39, %46 : vector<40x1xf32>
      %c5 = arith.constant 5 : index
      %c0_28 = arith.constant 0 : index
      %48 = vector.load %arg13[%c5, %c0_28] : memref<8x32xf32, #tpu.memory_space<vmem>>, vector<1x32xf32>
      %cst_29 = arith.constant 0.000000e+00 : f32
      %49 = vector.shape_cast %47 : vector<40x1xi1> to vector<40x1xi1>
      %50 = vector.broadcast %49 : vector<40x1xi1> to vector<40x32xi1>
      %51 = vector.shape_cast %48 : vector<1x32xf32> to vector<1x32xf32>
      %52 = vector.broadcast %51 : vector<1x32xf32> to vector<40x32xf32>
      %53 = vector.broadcast %cst_29 : f32 to vector<40x32xf32>
      %54 = arith.select %50, %52, %53 : vector<40x32xi1>, vector<40x32xf32>
      %55 = arith.addf %45, %54 : vector<40x32xf32>
      %c0_30 = arith.constant 0 : index
      %c0_31 = arith.constant 0 : index
      %56 = vector.load %arg14[%c0_30, %c0_31] : memref<40x32xf32, #tpu.memory_space<vmem>>, vector<40x32xf32>
      tpu.vector_store %arg14[%c0_30, %c0_31], %55 {strides = array<i32>} : memref<40x32xf32, #tpu.memory_space<vmem>>, vector<40x32xf32>,
    } else {
    }
    return
  }
  func.func @transform_0(%arg0: i32) -> (i32, i32) {
    %c0_i32 = arith.constant 0 : i32
    %c0_i32_0 = arith.constant 0 : i32
    %c0_i32_1 = arith.constant 0 : i32
    return %c0_i32, %c0_i32_0 : i32, i32
  }
  func.func @transform_1(%arg0: i32) -> (i32, i32) {
    %c0_i32 = arith.constant 0 : i32
    %c0_i32_0 = arith.constant 0 : i32
    %c0_i32_1 = arith.constant 0 : i32
    return %c0_i32, %c0_i32_0 : i32, i32
  }
  func.func @transform_2(%arg0: i32) -> (i32, i32) {
    %c0_i32 = arith.constant 0 : i32
    %c0_i32_0 = arith.constant 0 : i32
    %c0_i32_1 = arith.constant 0 : i32
    return %c0_i32, %c0_i32_0 : i32, i32
  }
  func.func @transform_3(%arg0: i32) -> (i32, i32) {
    %c0_i32 = arith.constant 0 : i32
    %c0_i32_0 = arith.constant 0 : i32
    return %arg0, %c0_i32 : i32, i32
  }
  func.func @transform_4(%arg0: i32) -> (i32, i32) {
    %c0_i32 = arith.constant 0 : i32
    %c0_i32_0 = arith.constant 0 : i32
    return %c0_i32, %arg0 : i32, i32
  }
  func.func @transform_5(%arg0: i32) -> (i32, i32) {
    %c0_i32 = arith.constant 0 : i32
    %c0_i32_0 = arith.constant 0 : i32
    %c0_i32_1 = arith.constant 0 : i32
    return %c0_i32, %c0_i32_0 : i32, i32
  }
  func.func @transform_6(%arg0: i32) -> (i32, i32) {
    %c0_i32 = arith.constant 0 : i32
    %c0_i32_0 = arith.constant 0 : i32
    %c0_i32_1 = arith.constant 0 : i32
    return %c0_i32, %c0_i32_0 : i32, i32
  }
  func.func @transform_7(%arg0: i32) -> (i32, i32) {
    %c0_i32 = arith.constant 0 : i32
    %c0_i32_0 = arith.constant 0 : i32
    %c0_i32_1 = arith.constant 0 : i32
    return %c0_i32, %c0_i32_0 : i32, i32
  }
  func.func @transform_8(%arg0: i32) -> (i32, i32) {
    %c0_i32 = arith.constant 0 : i32
    %c0_i32_0 = arith.constant 0 : i32
    %c0_i32_1 = arith.constant 0 : i32
    return %c0_i32, %c0_i32_0 : i32, i32
  }
  func.func @transform_9(%arg0: i32) -> (i32, i32) {
    %c0_i32 = arith.constant 0 : i32
    %c0_i32_0 = arith.constant 0 : i32
    %c0_i32_1 = arith.constant 0 : i32
    return %c0_i32, %c0_i32_0 : i32, i32
  }
  func.func @transform_10(%arg0: i32) -> (i32, i32) {
    %c0_i32 = arith.constant 0 : i32
    %c0_i32_0 = arith.constant 0 : i32
    %c0_i32_1 = arith.constant 0 : i32
    return %c0_i32, %c0_i32_0 : i32, i32
  }
  func.func @transform_11(%arg0: i32) -> (i32, i32) {
    %c0_i32 = arith.constant 0 : i32
    %c0_i32_0 = arith.constant 0 : i32
    %c0_i32_1 = arith.constant 0 : i32
    return %c0_i32, %c0_i32_0 : i32, i32
  }
  func.func @transform_12(%arg0: i32) -> (i32, i32) {
    %c0_i32 = arith.constant 0 : i32
    %c0_i32_0 = arith.constant 0 : i32
    %c0_i32_1 = arith.constant 0 : i32
    return %c0_i32, %c0_i32_0 : i32, i32
  }
  func.func @transform_13(%arg0: i32) -> (i32, i32) {
    %c0_i32 = arith.constant 0 : i32
    %c0_i32_0 = arith.constant 0 : i32
    %c0_i32_1 = arith.constant 0 : i32
    return %c0_i32, %c0_i32_0 : i32, i32
  }
}

</mosaic_0001>

<llo_original>
// kernel: tpu_custom_call.1
$region0: #{tpu_custom_call.1}
  #allocation0 [shape = 'u32[]', space=smem, size = 0x4, offset = 0x4, fixed_abs, tag = 'smem constant byte address 0x4 - core index']
  #allocation1 [shape = 'u32[144,128]{1,0:T(1,128)}', space=vmem, size = 0x12000, scoped, tag = 'internal scratch']
  #allocation2 [shape = 'bf16[96,33]{1,0:T(16,128)(2,1)}', space=vmem, size = 0x6000, scoped, tag = 'scratch operand']
  #allocation3 [shape = 'f32[40,1]{1,0:T(8,128)}', space=vmem, size = 0x5000, scoped, tag = 'scratch operand']
  %s0 = inlined_call_operand.vmem [shape: f32[96,16], index: 0, kind: input, shape index: {}]
  %s1 = inlined_call_operand.vmem [shape: s32[1,96], index: 1, kind: input, shape index: {}]
  %s2 = inlined_call_operand.vmem [shape: s32[96,1], index: 2, kind: input, shape index: {}]
  %s3 = inlined_call_operand.vmem [shape: s32[128,1], index: 3, kind: input, shape index: {}]
  %s4 = inlined_call_operand.vmem [shape: s32[1,128], index: 4, kind: input, shape index: {}]
  %s5 = inlined_call_operand.vmem [shape: f32[16,32], index: 5, kind: input, shape index: {}]
  %s6 = inlined_call_operand.vmem [shape: f32[16,16], index: 6, kind: input, shape index: {}]
  %s7 = inlined_call_operand.vmem [shape: f32[16,16], index: 7, kind: input, shape index: {}]
  %s8 = inlined_call_operand.vmem [shape: f32[16,32], index: 8, kind: input, shape index: {}]
  %s9 = inlined_call_operand.vmem [shape: f32[32,32], index: 9, kind: input, shape index: {}]
  %s10 = inlined_call_operand.vmem [shape: f32[32,32], index: 10, kind: input, shape index: {}]
  %s11 = inlined_call_operand.vmem [shape: f32[33,33], index: 11, kind: input, shape index: {}]
  %s12 = inlined_call_operand.vmem [shape: f32[8,32], index: 12, kind: input, shape index: {}]
  %s13 = inlined_call_operand.vmem [shape: f32[40,32], index: 13, kind: output, shape index: {}]
  %s14 = sld [smem:[#allocation0]]
  $region70: #{tpu_custom_call.1} parent=0
    _
  %s16 = ssub.s32 1, %s14
  %s17 = scalar_select 0, %s16, %s14
  // Predicated region
  $region2: #{tpu_custom_call.1} parent=0 // pred_check
    _
  $region3: #{tpu_custom_call.1} parent=0 // pred_check_branch
    %19 = sbr.rel (0) target = $region5
  $region4: #{tpu_custom_call.1} parent=0 // pred_region
    _
  $region5: #{tpu_custom_call.1} parent=0 // pred_fallthru
    _
  // Predicated region
  $region6: #{tpu_custom_call.1} parent=0 // pred_check
    _
  $region7: #{tpu_custom_call.1} parent=0 // pred_check_branch
    %21 = sbr.rel (0) target = $region9
  $region8: #{tpu_custom_call.1} parent=0 // pred_region
    _
  $region9: #{tpu_custom_call.1} parent=0 // pred_fallthru
    _
  // Predicated region
  $region10: #{tpu_custom_call.1} parent=0 // pred_check
    _
  $region11: #{tpu_custom_call.1} parent=0 // pred_check_branch
    %23 = sbr.rel (0) target = $region13
  $region12: #{tpu_custom_call.1} parent=0 // pred_region
    _
  $region13: #{tpu_custom_call.1} parent=0 // pred_fallthru
    _
  // Predicated region
  $region14: #{tpu_custom_call.1} parent=0 // pred_check
    _
  $region15: #{tpu_custom_call.1} parent=0 // pred_check_branch
    %25 = sbr.rel (0) target = $region17
  $region16: #{tpu_custom_call.1} parent=0 // pred_region
    _
  $region17: #{tpu_custom_call.1} parent=0 // pred_fallthru
    _
  // Predicated region
  $region18: #{tpu_custom_call.1} parent=0 // pred_check
    _
  $region19: #{tpu_custom_call.1} parent=0 // pred_check_branch
    %27 = sbr.rel (0) target = $region21
  $region20: #{tpu_custom_call.1} parent=0 // pred_region
    _
  $region21: #{tpu_custom_call.1} parent=0 // pred_fallthru
    _
  // Predicated region
  $region22: #{tpu_custom_call.1} parent=0 // pred_check
    _
  $region23: #{tpu_custom_call.1} parent=0 // pred_check_branch
    %29 = sbr.rel (0) target = $region25
  $region24: #{tpu_custom_call.1} parent=0 // pred_region
    _
  $region25: #{tpu_custom_call.1} parent=0 // pred_fallthru
    _
  // Predicated region
  $region26: #{tpu_custom_call.1} parent=0 // pred_check
    _
  $region27: #{tpu_custom_call.1} parent=0 // pred_check_branch
    %31 = sbr.rel (0) target = $region29
  $region28: #{tpu_custom_call.1} parent=0 // pred_region
    _
  $region29: #{tpu_custom_call.1} parent=0 // pred_fallthru
    _
  // Predicated region
  $region30: #{tpu_custom_call.1} parent=0 // pred_check
    _
  $region31: #{tpu_custom_call.1} parent=0 // pred_check_branch
    %33 = sbr.rel (0) target = $region33
  $region32: #{tpu_custom_call.1} parent=0 // pred_region
    _
  $region33: #{tpu_custom_call.1} parent=0 // pred_fallthru
    _
  // Predicated region
  $region34: #{tpu_custom_call.1} parent=0 // pred_check
    _
  $region35: #{tpu_custom_call.1} parent=0 // pred_check_branch
    %35 = sbr.rel (0) target = $region37
  $region36: #{tpu_custom_call.1} parent=0 // pred_region
    _
  $region37: #{tpu_custom_call.1} parent=0 // pred_fallthru
    _
  // Predicated region
  $region38: #{tpu_custom_call.1} parent=0 // pred_check
    _
  $region39: #{tpu_custom_call.1} parent=0 // pred_check_branch
    %37 = sbr.rel (0) target = $region41
  $region40: #{tpu_custom_call.1} parent=0 // pred_region
    _
  $region41: #{tpu_custom_call.1} parent=0 // pred_fallthru
    _
  // Predicated region
  $region42: #{tpu_custom_call.1} parent=0 // pred_check
    _
  $region43: #{tpu_custom_call.1} parent=0 // pred_check_branch
    %39 = sbr.rel (0) target = $region45
  $region44: #{tpu_custom_call.1} parent=0 // pred_region
    _
  $region45: #{tpu_custom_call.1} parent=0 // pred_fallthru
    _
  // Predicated region
  $region46: #{tpu_custom_call.1} parent=0 // pred_check
    _
  $region47: #{tpu_custom_call.1} parent=0 // pred_check_branch
    %41 = sbr.rel (0) target = $region49
  $region48: #{tpu_custom_call.1} parent=0 // pred_region
    _
  $region49: #{tpu_custom_call.1} parent=0 // pred_fallthru
    _
  // Predicated region
  $region50: #{tpu_custom_call.1} parent=0 // pred_check
    _
  $region51: #{tpu_custom_call.1} parent=0 // pred_check_branch
    %43 = sbr.rel (0) target = $region53
  $region52: #{tpu_custom_call.1} parent=0 // pred_region
    _
  $region53: #{tpu_custom_call.1} parent=0 // pred_fallthru
    _
  %p46 = scmp.eq.s32.totalorder 0, 0
  // Predicated region
  $region54: #{tpu_custom_call.1} parent=0 // pred_check
    %p47 = pneg %p46
  $region55: #{tpu_custom_call.1} parent=0 // pred_check_branch
    %49 = sbr.rel (%p47) target = $region57
  $region56: #{tpu_custom_call.1} parent=0 // pred_region
    %v50 = vld [vmem:[%s0] sm:$0xff]
    %v51 = vld [vmem:[%s0 + $0x8] sm:$0xff]
    %v52 = vld [vmem:[%s0 + $0x10] sm:$0xff]
    %v53 = vld [vmem:[%s0 + $0x18] sm:$0xff]
    %v54 = vld [vmem:[%s0 + $0x20] sm:$0xff]
    %v55 = vld [vmem:[%s0 + $0x28] sm:$0xff]
    %v56 = vld [vmem:[%s0 + $0x30] sm:$0xff]
    %v57 = vld [vmem:[%s0 + $0x38] sm:$0xff]
    %v58 = vld [vmem:[%s0 + $0x40] sm:$0xff]
    %v59 = vld [vmem:[%s0 + $0x48] sm:$0xff]
    %v60 = vld [vmem:[%s0 + $0x50] sm:$0xff]
    %v61 = vld [vmem:[%s0 + $0x58] sm:$0xff]
    %v62 = vlaneseq
    %v63 = vshrl.u32 %v62, 7
    %v64 = vadd.s32 %v63, 8
    %v65 = vadd.s32 %v63, 16
    %v66 = vadd.s32 %v63, 24
    %v67 = vadd.s32 %v63, 32
    %v68 = vadd.s32 %v63, 40
    %v69 = vadd.s32 %v63, 48
    %v70 = vadd.s32 %v63, 56
    %v71 = vadd.s32 %v63, 64
    %v72 = vadd.s32 %v63, 72
    %v73 = vadd.s32 %v63, 80
    %v74 = vadd.s32 %v63, 88
    %v75 = vld [vmem:[%s1] sm:$0x1]
    %v76 = vlaneseq
    %v77 = vshrl.u32 %v76, 7
    %v78 = vsub.s32 0, %v77
    %v79 = vrot.slane %v75, %v78
    %vm80 = vcmp.eq.s32.totalorder %v63, %v79
    %vm81 = vcmp.eq.s32.totalorder %v64, %v79
    %vm82 = vcmp.eq.s32.totalorder %v65, %v79
    %vm83 = vcmp.eq.s32.totalorder %v66, %v79
    %vm84 = vcmp.eq.s32.totalorder %v67, %v79
    %vm85 = vcmp.eq.s32.totalorder %v68, %v79
    %vm86 = vcmp.eq.s32.totalorder %v69, %v79
    %vm87 = vcmp.eq.s32.totalorder %v70, %v79
    %vm88 = vcmp.eq.s32.totalorder %v71, %v79
    %vm89 = vcmp.eq.s32.totalorder %v72, %v79
    %vm90 = vcmp.eq.s32.totalorder %v73, %v79
    %vm91 = vcmp.eq.s32.totalorder %v74, %v79
    %v92 = vsel %vm80, 1, 0
    %v93 = vsel %vm81, 1, 0
    %v94 = vsel %vm82, 1, 0
    %v95 = vsel %vm83, 1, 0
    %v96 = vsel %vm84, 1, 0
    %v97 = vsel %vm85, 1, 0
    %v98 = vsel %vm86, 1, 0
    %v99 = vsel %vm87, 1, 0
    %v100 = vsel %vm88, 1, 0
    %v101 = vsel %vm89, 1, 0
    %v102 = vsel %vm90, 1, 0
    %v103 = vsel %vm91, 1, 0
    %v104 = vcvt.s32.f32 %v92
    %v105 = vcvt.s32.f32 %v93
    %v106 = vcvt.s32.f32 %v94
    %v107 = vcvt.s32.f32 %v95
    %v108 = vcvt.s32.f32 %v96
    %v109 = vcvt.s32.f32 %v97
    %v110 = vcvt.s32.f32 %v98
    %v111 = vcvt.s32.f32 %v99
    %v112 = vcvt.s32.f32 %v100
    %v113 = vcvt.s32.f32 %v101
    %v114 = vcvt.s32.f32 %v102
    %v115 = vcvt.s32.f32 %v103
    %vm116 = vcmask 785408
    %v118 = vsel %vm116, %v104, 0
    %v121 = vsel %vm116, %v105, 0
    %v124 = vsel %vm116, %v106, 0
    %v127 = vsel %vm116, %v107, 0
    %v130 = vsel %vm116, %v108, 0
    %v133 = vsel %vm116, %v109, 0
    %v136 = vsel %vm116, %v110, 0
    %v139 = vsel %vm116, %v111, 0
    %v142 = vsel %vm116, %v112, 0
    %v145 = vsel %vm116, %v113, 0
    %v148 = vsel %vm116, %v114, 0
    %v151 = vsel %vm116, %v115, 0
    %153 = vmatprep.subr.mxu0 0.0
    %154 = vmatpush1.msra.mxu0 %v50
    %155 = vmatprep.subr.mxu0 0.0
    %156 = vmatpush1.msra.mxu0 %v51
    %157 = vmatprep.subr.mxu0 0.0
    %158 = vmatpush1.msra.mxu0 %v52
    %159 = vmatprep.subr.mxu0 0.0
    %160 = vmatpush1.msra.mxu0 %v53
    %161 = vmatprep.subr.mxu0 0.0
    %162 = vmatpush1.msra.mxu0 %v54
    %163 = vmatprep.subr.mxu0 0.0
    %164 = vmatpush1.msra.mxu0 %v55
    %165 = vmatprep.subr.mxu0 0.0
    %166 = vmatpush1.msra.mxu0 %v56
    %167 = vmatprep.subr.mxu0 0.0
    %168 = vmatpush1.msra.mxu0 %v57
    %169 = vmatprep.subr.mxu0 0.0
    %170 = vmatpush1.msra.mxu0 %v58
    %171 = vmatprep.subr.mxu0 0.0
    %172 = vmatpush1.msra.mxu0 %v59
    %173 = vmatprep.subr.mxu0 0.0
    %174 = vmatpush1.msra.mxu0 %v60
    %175 = vmatprep.subr.mxu0 0.0
    %176 = vmatpush1.msra.mxu0 %v61
    %177 = vmatprep.subr.mxu0 0.0
    %178 = vmatpush1.msra.mxu0 0.0
    %179 = vmatprep.subr.mxu0 0.0
    %180 = vmatpush1.msra.mxu0 0.0
    %181 = vmatprep.subr.mxu0 0.0
    %182 = vmatpush1.msra.mxu0 0.0
    %183 = vmatprep.subr.mxu0 0.0
    %184 = vmatpush1.msra.mxu0 0.0
    %185 = vmatprep.subr.mxu0 0.0
    %186 = vmatpush1.msra.mxu0 0.0
    %187 = vmatprep.subr.mxu0 0.0
    %188 = vmatpush1.msra.mxu0 0.0
    %189 = vmatprep.subr.mxu0 0.0
    %190 = vmatpush1.msra.mxu0 0.0
    %191 = vmatprep.subr.mxu0 0.0
    %192 = vmatpush1.msra.mxu0 0.0
    %193 = vmatprep.subr.mxu0 0.0
    %194 = vmatpush1.msra.mxu0 0.0
    %195 = vmatprep.subr.mxu0 0.0
    %196 = vmatpush1.msra.mxu0 0.0
    %197 = vmatprep.subr.mxu0 0.0
    %198 = vmatpush1.msra.mxu0 0.0
    %199 = vmatprep.subr.mxu0 0.0
    %200 = vmatpush1.msra.mxu0 0.0
    %201 = vmatprep.subr.mxu0 0.0
    %202 = vmatpush1.msra.mxu0 0.0
    %203 = vmatprep.subr.mxu0 0.0
    %204 = vmatpush1.msra.mxu0 0.0
    %205 = vmatprep.subr.mxu0 0.0
    %206 = vmatpush1.msra.mxu0 0.0
    %207 = vmatprep.subr.mxu0 0.0
    %208 = vmatpush1.msra.mxu0 0.0
    %209 = vmatprep.subr.mxu0 0.0
    %210 = vmatpush1.msra.mxu0 0.0
    %211 = vmatprep.subr.mxu0 0.0
    %212 = vmatpush1.msra.mxu0 0.0
    %213 = vmatprep.subr.mxu0 0.0
    %214 = vmatpush1.msra.mxu0 0.0
    %215 = vmatprep.subr.mxu0 0.0
    %216 = vmatpush1.msra.mxu0 0.0
    %217 = vmatprep.mubr.f32.mxu0 0.0
    %218 = vmatmul.mubr.f32.gmra.mrb[0].mxu0 %v118
    %v219 = vpop.f32.mrb[0].mxu0
    %v220 = vadd.f32 0.0, %v219
    %v221 = vpop.f32.mrb[0].mxu0
    %222 = vmatprep.mubr.f32.mxu0 0.0
    %223 = vmatmul.mubr.f32.gmra.mrb[0].mxu0 %v121
    %v224 = vpop.f32.mrb[0].mxu0
    %v225 = vadd.f32 0.0, %v224
    %v226 = vpop.f32.mrb[0].mxu0
    %227 = vmatprep.mubr.f32.mxu0 0.0
    %228 = vmatmul.mubr.f32.gmra.mrb[0].mxu0 %v124
    %v229 = vpop.f32.mrb[0].mxu0
    %v230 = vadd.f32 0.0, %v229
    %v231 = vpop.f32.mrb[0].mxu0
    %232 = vmatprep.mubr.f32.mxu0 0.0
    %233 = vmatmul.mubr.f32.gmra.mrb[0].mxu0 %v127
    %v234 = vpop.f32.mrb[0].mxu0
    %v235 = vadd.f32 0.0, %v234
    %v236 = vpop.f32.mrb[0].mxu0
    %237 = vmatprep.mubr.f32.mxu0 0.0
    %238 = vmatmul.mubr.f32.gmra.mrb[0].mxu0 %v130
    %v239 = vpop.f32.mrb[0].mxu0
    %v240 = vadd.f32 0.0, %v239
    %v241 = vpop.f32.mrb[0].mxu0
    %242 = vmatprep.mubr.f32.mxu0 0.0
    %243 = vmatmul.mubr.f32.gmra.mrb[0].mxu0 %v133
    %v244 = vpop.f32.mrb[0].mxu0
    %v245 = vadd.f32 0.0, %v244
    %v246 = vpop.f32.mrb[0].mxu0
    %247 = vmatprep.mubr.f32.mxu0 0.0
    %248 = vmatmul.mubr.f32.gmra.mrb[0].mxu0 %v136
    %v249 = vpop.f32.mrb[0].mxu0
    %v250 = vadd.f32 0.0, %v249
    %v251 = vpop.f32.mrb[0].mxu0
    %252 = vmatprep.mubr.f32.mxu0 0.0
    %253 = vmatmul.mubr.f32.gmra.mrb[0].mxu0 %v139
    %v254 = vpop.f32.mrb[0].mxu0
    %v255 = vadd.f32 0.0, %v254
    %v256 = vpop.f32.mrb[0].mxu0
    %257 = vmatprep.mubr.f32.mxu0 0.0
    %258 = vmatmul.mubr.f32.gmra.mrb[0].mxu0 %v142
    %v259 = vpop.f32.mrb[0].mxu0
    %v260 = vadd.f32 0.0, %v259
    %v261 = vpop.f32.mrb[0].mxu0
    %262 = vmatprep.mubr.f32.mxu0 0.0
    %263 = vmatmul.mubr.f32.gmra.mrb[0].mxu0 %v145
    %v264 = vpop.f32.mrb[0].mxu0
    %v265 = vadd.f32 0.0, %v264
    %v266 = vpop.f32.mrb[0].mxu0
    %267 = vmatprep.mubr.f32.mxu0 0.0
    %268 = vmatmul.mubr.f32.gmra.mrb[0].mxu0 %v148
    %v269 = vpop.f32.mrb[0].mxu0
    %v270 = vadd.f32 0.0, %v269
    %v271 = vpop.f32.mrb[0].mxu0
    %272 = vmatprep.mubr.f32.mxu0 0.0
    %273 = vmatmul.mubr.f32.gmra.mrb[0].mxu0 %v151
    %v274 = vpop.f32.mrb[0].mxu0
    %v275 = vadd.f32 0.0, %v274
    %v276 = vpop.f32.mrb[0].mxu0
    %277 = vdwg.mxu0
    %v278 = vsel %vm116, %v104, 0.0
    %279 = vadd.xlane.f32.xlu0 %v278
    %v280 = vpop.xlane.xlu0 %279
    %v281 = vsel %vm116, %v105, 0.0
    %282 = vadd.xlane.f32.xlu0 %v281
    %v283 = vpop.xlane.xlu0 %282
    %v284 = vsel %vm116, %v106, 0.0
    %285 = vadd.xlane.f32.xlu0 %v284
    %v286 = vpop.xlane.xlu0 %285
    %v287 = vsel %vm116, %v107, 0.0
    %288 = vadd.xlane.f32.xlu0 %v287
    %v289 = vpop.xlane.xlu0 %288
    %v290 = vsel %vm116, %v108, 0.0
    %291 = vadd.xlane.f32.xlu0 %v290
    %v292 = vpop.xlane.xlu0 %291
    %v293 = vsel %vm116, %v109, 0.0
    %294 = vadd.xlane.f32.xlu0 %v293
    %v295 = vpop.xlane.xlu0 %294
    %v296 = vsel %vm116, %v110, 0.0
    %297 = vadd.xlane.f32.xlu0 %v296
    %v298 = vpop.xlane.xlu0 %297
    %v299 = vsel %vm116, %v111, 0.0
    %300 = vadd.xlane.f32.xlu0 %v299
    %v301 = vpop.xlane.xlu0 %300
    %v302 = vsel %vm116, %v112, 0.0
    %303 = vadd.xlane.f32.xlu0 %v302
    %v304 = vpop.xlane.xlu0 %303
    %v305 = vsel %vm116, %v113, 0.0
    %306 = vadd.xlane.f32.xlu0 %v305
    %v307 = vpop.xlane.xlu0 %306
    %v308 = vsel %vm116, %v114, 0.0
    %309 = vadd.xlane.f32.xlu0 %v308
    %v310 = vpop.xlane.xlu0 %309
    %v311 = vsel %vm116, %v115, 0.0
    %312 = vadd.xlane.f32.xlu0 %v311
    %v313 = vpop.xlane.xlu0 %312
    %v314 = vmax.f32 %v280, 1.0
    %v315 = vmax.f32 %v283, 1.0
    %v316 = vmax.f32 %v286, 1.0
    %v317 = vmax.f32 %v289, 1.0
    %v318 = vmax.f32 %v292, 1.0
    %v319 = vmax.f32 %v295, 1.0
    %v320 = vmax.f32 %v298, 1.0
    %v321 = vmax.f32 %v301, 1.0
    %v322 = vmax.f32 %v304, 1.0
    %v323 = vmax.f32 %v307, 1.0
    %v324 = vmax.f32 %v310, 1.0
    %v325 = vmax.f32 %v313, 1.0
    %v326 = vrcp.pop %v314
    %v327 = vrcp.pop %v315
    %v328 = vrcp.pop %v316
    %v329 = vrcp.pop %v317
    %v330 = vrcp.pop %v318
    %v331 = vrcp.pop %v319
    %v332 = vrcp.pop %v320
    %v333 = vrcp.pop %v321
    %v334 = vrcp.pop %v322
    %v335 = vrcp.pop %v323
    %v336 = vrcp.pop %v324
    %v337 = vrcp.pop %v325
    %v338 = vmul.f32 %v220, %v326
    %v339 = vmul.f32 %v225, %v327
    %v340 = vmul.f32 %v230, %v328
    %v341 = vmul.f32 %v235, %v329
    %v342 = vmul.f32 %v240, %v330
    %v343 = vmul.f32 %v245, %v331
    %v344 = vmul.f32 %v250, %v332
    %v345 = vmul.f32 %v255, %v333
    %v346 = vmul.f32 %v260, %v334
    %v347 = vmul.f32 %v265, %v335
    %v348 = vmul.f32 %v270, %v336
    %v349 = vmul.f32 %v275, %v337
    %v350 = vld [vmem:[%s5] sm:$0xff]
    %v351 = vld [vmem:[%s5 + $0x8] sm:$0xff]
    %v352 = vld [vmem:[%s12] sm:$0x1]
    %v353 = vlaneseq
    %v354 = vshrl.u32 %v353, 7
    %v355 = vsub.s32 0, %v354
    %v356 = vrot.slane %v352, %v355
    %vm357 = vcmask 130048
    %v359 = vsel %vm357, %v50, 0
    %v362 = vsel %vm357, %v51, 0
    %v365 = vsel %vm357, %v52, 0
    %v368 = vsel %vm357, %v53, 0
    %v371 = vsel %vm357, %v54, 0
    %v374 = vsel %vm357, %v55, 0
    %v377 = vsel %vm357, %v56, 0
    %v380 = vsel %vm357, %v57, 0
    %v383 = vsel %vm357, %v58, 0
    %v386 = vsel %vm357, %v59, 0
    %v389 = vsel %vm357, %v60, 0
    %v392 = vsel %vm357, %v61, 0
    %394 = vmatprep.subr.mxu0 0.0
    %395 = vmatpush1.msra.mxu0 %v350
    %396 = vmatprep.subr.mxu0 0.0
    %397 = vmatpush1.msra.mxu0 %v351
    %398 = vmatprep.subr.mxu0 0.0
    %399 = vmatpush1.msra.mxu0 0.0
    %400 = vmatprep.subr.mxu0 0.0
    %401 = vmatpush1.msra.mxu0 0.0
    %402 = vmatprep.subr.mxu0 0.0
    %403 = vmatpush1.msra.mxu0 0.0
    %404 = vmatprep.subr.mxu0 0.0
    %405 = vmatpush1.msra.mxu0 0.0
    %406 = vmatprep.subr.mxu0 0.0
    %407 = vmatpush1.msra.mxu0 0.0
    %408 = vmatprep.subr.mxu0 0.0
    %409 = vmatpush1.msra.mxu0 0.0
    %410 = vmatprep.subr.mxu0 0.0
    %411 = vmatpush1.msra.mxu0 0.0
    %412 = vmatprep.subr.mxu0 0.0
    %413 = vmatpush1.msra.mxu0 0.0
    %414 = vmatprep.subr.mxu0 0.0
    %415 = vmatpush1.msra.mxu0 0.0
    %416 = vmatprep.subr.mxu0 0.0
    %417 = vmatpush1.msra.mxu0 0.0
    %418 = vmatprep.subr.mxu0 0.0
    %419 = vmatpush1.msra.mxu0 0.0
    %420 = vmatprep.subr.mxu0 0.0
    %421 = vmatpush1.msra.mxu0 0.0
    %422 = vmatprep.subr.mxu0 0.0
    %423 = vmatpush1.msra.mxu0 0.0
    %424 = vmatprep.subr.mxu0 0.0
    %425 = vmatpush1.msra.mxu0 0.0
    %426 = vmatprep.subr.mxu0 0.0
    %427 = vmatpush1.msra.mxu0 0.0
    %428 = vmatprep.subr.mxu0 0.0
    %429 = vmatpush1.msra.mxu0 0.0
    %430 = vmatprep.subr.mxu0 0.0
    %431 = vmatpush1.msra.mxu0 0.0
    %432 = vmatprep.subr.mxu0 0.0
    %433 = vmatpush1.msra.mxu0 0.0
    %434 = vmatprep.subr.mxu0 0.0
    %435 = vmatpush1.msra.mxu0 0.0
    %436 = vmatprep.subr.mxu0 0.0
    %437 = vmatpush1.msra.mxu0 0.0
    %438 = vmatprep.subr.mxu0 0.0
    %439 = vmatpush1.msra.mxu0 0.0
    %440 = vmatprep.subr.mxu0 0.0
    %441 = vmatpush1.msra.mxu0 0.0
    %442 = vmatprep.subr.mxu0 0.0
    %443 = vmatpush1.msra.mxu0 0.0
    %444 = vmatprep.subr.mxu0 0.0
    %445 = vmatpush1.msra.mxu0 0.0
    %446 = vmatprep.subr.mxu0 0.0
    %447 = vmatpush1.msra.mxu0 0.0
    %448 = vmatprep.subr.mxu0 0.0
    %449 = vmatpush1.msra.mxu0 0.0
    %450 = vmatprep.subr.mxu0 0.0
    %451 = vmatpush1.msra.mxu0 0.0
    %452 = vmatprep.subr.mxu0 0.0
    %453 = vmatpush1.msra.mxu0 0.0
    %454 = vmatprep.subr.mxu0 0.0
    %455 = vmatpush1.msra.mxu0 0.0
    %456 = vmatprep.subr.mxu0 0.0
    %457 = vmatpush1.msra.mxu0 0.0
    %458 = vmatprep.mubr.f32.mxu0 0.0
    %459 = vmatmul.mubr.f32.gmra.mrb[0].mxu0 %v359
    %v460 = vpop.f32.mrb[0].mxu0
    %v461 = vadd.f32 %v356, %v460
    %v462 = vpop.f32.mrb[0].mxu0
    %463 = vmatprep.mubr.f32.mxu0 0.0
    %464 = vmatmul.mubr.f32.gmra.mrb[0].mxu0 %v362
    %v465 = vpop.f32.mrb[0].mxu0
    %v466 = vadd.f32 %v356, %v465
    %v467 = vpop.f32.mrb[0].mxu0
    %468 = vmatprep.mubr.f32.mxu0 0.0
    %469 = vmatmul.mubr.f32.gmra.mrb[0].mxu0 %v365
    %v470 = vpop.f32.mrb[0].mxu0
    %v471 = vadd.f32 %v356, %v470
    %v472 = vpop.f32.mrb[0].mxu0
    %473 = vmatprep.mubr.f32.mxu0 0.0
    %474 = vmatmul.mubr.f32.gmra.mrb[0].mxu0 %v368
    %v475 = vpop.f32.mrb[0].mxu0
    %v476 = vadd.f32 %v356, %v475
    %v477 = vpop.f32.mrb[0].mxu0
    %478 = vmatprep.mubr.f32.mxu0 0.0
    %479 = vmatmul.mubr.f32.gmra.mrb[0].mxu0 %v371
    %v480 = vpop.f32.mrb[0].mxu0
    %v481 = vadd.f32 %v356, %v480
    %v482 = vpop.f32.mrb[0].mxu0
    %483 = vmatprep.mubr.f32.mxu0 0.0
    %484 = vmatmul.mubr.f32.gmra.mrb[0].mxu0 %v374
    %v485 = vpop.f32.mrb[0].mxu0
    %v486 = vadd.f32 %v356, %v485
    %v487 = vpop.f32.mrb[0].mxu0
    %488 = vmatprep.mubr.f32.mxu0 0.0
    %489 = vmatmul.mubr.f32.gmra.mrb[0].mxu0 %v377
    %v490 = vpop.f32.mrb[0].mxu0
    %v491 = vadd.f32 %v356, %v490
    %v492 = vpop.f32.mrb[0].mxu0
    %493 = vmatprep.mubr.f32.mxu0 0.0
    %494 = vmatmul.mubr.f32.gmra.mrb[0].mxu0 %v380
    %v495 = vpop.f32.mrb[0].mxu0
    %v496 = vadd.f32 %v356, %v495
    %v497 = vpop.f32.mrb[0].mxu0
    %498 = vmatprep.mubr.f32.mxu0 0.0
    %499 = vmatmul.mubr.f32.gmra.mrb[0].mxu0 %v383
    %v500 = vpop.f32.mrb[0].mxu0
    %v501 = vadd.f32 %v356, %v500
    %v502 = vpop.f32.mrb[0].mxu0
    %503 = vmatprep.mubr.f32.mxu0 0.0
    %504 = vmatmul.mubr.f32.gmra.mrb[0].mxu0 %v386
    %v505 = vpop.f32.mrb[0].mxu0
    %v506 = vadd.f32 %v356, %v505
    %v507 = vpop.f32.mrb[0].mxu0
    %508 = vmatprep.mubr.f32.mxu0 0.0
    %509 = vmatmul.mubr.f32.gmra.mrb[0].mxu0 %v389
    %v510 = vpop.f32.mrb[0].mxu0
    %v511 = vadd.f32 %v356, %v510
    %v512 = vpop.f32.mrb[0].mxu0
    %513 = vmatprep.mubr.f32.mxu0 0.0
    %514 = vmatmul.mubr.f32.gmra.mrb[0].mxu0 %v392
    %v515 = vpop.f32.mrb[0].mxu0
    %v516 = vadd.f32 %v356, %v515
    %v517 = vpop.f32.mrb[0].mxu0
    %518 = vdwg.mxu0
    %vm519 = vcmp.ge.f32.partialorder %v461, 0.0
    %vm520 = vcmp.ge.f32.partialorder %v466, 0.0
    %vm521 = vcmp.ge.f32.partialorder %v471, 0.0
    %vm522 = vcmp.ge.f32.partialorder %v476, 0.0
    %vm523 = vcmp.ge.f32.partialorder %v481, 0.0
    %vm524 = vcmp.ge.f32.partialorder %v486, 0.0
    %vm525 = vcmp.ge.f32.partialorder %v491, 0.0
    %vm526 = vcmp.ge.f32.partialorder %v496, 0.0
    %vm527 = vcmp.ge.f32.partialorder %v501, 0.0
    %vm528 = vcmp.ge.f32.partialorder %v506, 0.0
    %vm529 = vcmp.ge.f32.partialorder %v511, 0.0
    %vm530 = vcmp.ge.f32.partialorder %v516, 0.0
    %v531 = vmul.f32 %v461, 0.1
    %v532 = vmul.f32 %v466, 0.1
    %v533 = vmul.f32 %v471, 0.1
    %v534 = vmul.f32 %v476, 0.1
    %v535 = vmul.f32 %v481, 0.1
    %v536 = vmul.f32 %v486, 0.1
    %v537 = vmul.f32 %v491, 0.1
    %v538 = vmul.f32 %v496, 0.1
    %v539 = vmul.f32 %v501, 0.1
    %v540 = vmul.f32 %v506, 0.1
    %v541 = vmul.f32 %v511, 0.1
    %v542 = vmul.f32 %v516, 0.1
    %v543 = vsel %vm519, %v461, %v531
    %v544 = vsel %vm520, %v466, %v532
    %v545 = vsel %vm521, %v471, %v533
    %v546 = vsel %vm522, %v476, %v534
    %v547 = vsel %vm523, %v481, %v535
    %v548 = vsel %vm524, %v486, %v536
    %v549 = vsel %vm525, %v491, %v537
    %v550 = vsel %vm526, %v496, %v538
    %v551 = vsel %vm527, %v501, %v539
    %v552 = vsel %vm528, %v506, %v540
    %v553 = vsel %vm529, %v511, %v541
    %v554 = vsel %vm530, %v516, %v542
    %v555 = vld [vmem:[%s6] sm:$0xff]
    %v556 = vld [vmem:[%s6 + $0x8] sm:$0xff]
    %v557 = vld [vmem:[%s12 + $0x1] sm:$0x1]
    %v558 = vlaneseq
    %v559 = vshrl.u32 %v558, 7
    %v560 = vsub.s32 0, %v559
    %v561 = vrot.slane %v557, %v560
    %v563 = vsel %vm357, %v338, 0
    %v566 = vsel %vm357, %v339, 0
    %v569 = vsel %vm357, %v340, 0
    %v572 = vsel %vm357, %v341, 0
    %v575 = vsel %vm357, %v342, 0
    %v578 = vsel %vm357, %v343, 0
    %v581 = vsel %vm357, %v344, 0
    %v584 = vsel %vm357, %v345, 0
    %v587 = vsel %vm357, %v346, 0
    %v590 = vsel %vm357, %v347, 0
    %v593 = vsel %vm357, %v348, 0
    %v596 = vsel %vm357, %v349, 0
    %598 = vmatprep.subr.mxu0 0.0
    %599 = vmatpush1.msra.mxu0 %v555
    %600 = vmatprep.subr.mxu0 0.0
    %601 = vmatpush1.msra.mxu0 %v556
    %602 = vmatprep.subr.mxu0 0.0
    %603 = vmatpush1.msra.mxu0 0.0
    %604 = vmatprep.subr.mxu0 0.0
    %605 = vmatpush1.msra.mxu0 0.0
    %606 = vmatprep.subr.mxu0 0.0
    %607 = vmatpush1.msra.mxu0 0.0
    %608 = vmatprep.subr.mxu0 0.0
    %609 = vmatpush1.msra.mxu0 0.0
    %610 = vmatprep.subr.mxu0 0.0
    %611 = vmatpush1.msra.mxu0 0.0
    %612 = vmatprep.subr.mxu0 0.0
    %613 = vmatpush1.msra.mxu0 0.0
    %614 = vmatprep.subr.mxu0 0.0
    %615 = vmatpush1.msra.mxu0 0.0
    %616 = vmatprep.subr.mxu0 0.0
    %617 = vmatpush1.msra.mxu0 0.0
    %618 = vmatprep.subr.mxu0 0.0
    %619 = vmatpush1.msra.mxu0 0.0
    %620 = vmatprep.subr.mxu0 0.0
    %621 = vmatpush1.msra.mxu0 0.0
    %622 = vmatprep.subr.mxu0 0.0
    %623 = vmatpush1.msra.mxu0 0.0
    %624 = vmatprep.subr.mxu0 0.0
    %625 = vmatpush1.msra.mxu0 0.0
    %626 = vmatprep.subr.mxu0 0.0
    %627 = vmatpush1.msra.mxu0 0.0
    %628 = vmatprep.subr.mxu0 0.0
    %629 = vmatpush1.msra.mxu0 0.0
    %630 = vmatprep.subr.mxu0 0.0
    %631 = vmatpush1.msra.mxu0 0.0
    %632 = vmatprep.subr.mxu0 0.0
    %633 = vmatpush1.msra.mxu0 0.0
    %634 = vmatprep.subr.mxu0 0.0
    %635 = vmatpush1.msra.mxu0 0.0
    %636 = vmatprep.subr.mxu0 0.0
    %637 = vmatpush1.msra.mxu0 0.0
    %638 = vmatprep.subr.mxu0 0.0
    %639 = vmatpush1.msra.mxu0 0.0
    %640 = vmatprep.subr.mxu0 0.0
    %641 = vmatpush1.msra.mxu0 0.0
    %642 = vmatprep.subr.mxu0 0.0
    %643 = vmatpush1.msra.mxu0 0.0
    %644 = vmatprep.subr.mxu0 0.0
    %645 = vmatpush1.msra.mxu0 0.0
    %646 = vmatprep.subr.mxu0 0.0
    %647 = vmatpush1.msra.mxu0 0.0
    %648 = vmatprep.subr.mxu0 0.0
    %649 = vmatpush1.msra.mxu0 0.0
    %650 = vmatprep.subr.mxu0 0.0
    %651 = vmatpush1.msra.mxu0 0.0
    %652 = vmatprep.subr.mxu0 0.0
    %653 = vmatpush1.msra.mxu0 0.0
    %654 = vmatprep.subr.mxu0 0.0
    %655 = vmatpush1.msra.mxu0 0.0
    %656 = vmatprep.subr.mxu0 0.0
    %657 = vmatpush1.msra.mxu0 0.0
    %658 = vmatprep.subr.mxu0 0.0
    %659 = vmatpush1.msra.mxu0 0.0
    %660 = vmatprep.subr.mxu0 0.0
    %661 = vmatpush1.msra.mxu0 0.0
    %662 = vmatprep.mubr.f32.mxu0 0.0
    %663 = vmatmul.mubr.f32.gmra.mrb[0].mxu0 %v563
    %v664 = vpop.f32.mrb[0].mxu0
    %v665 = vadd.f32 %v561, %v664
    %v666 = vpop.f32.mrb[0].mxu0
    %667 = vmatprep.mubr.f32.mxu0 0.0
    %668 = vmatmul.mubr.f32.gmra.mrb[0].mxu0 %v566
    %v669 = vpop.f32.mrb[0].mxu0
    %v670 = vadd.f32 %v561, %v669
    %v671 = vpop.f32.mrb[0].mxu0
    %672 = vmatprep.mubr.f32.mxu0 0.0
    %673 = vmatmul.mubr.f32.gmra.mrb[0].mxu0 %v569
    %v674 = vpop.f32.mrb[0].mxu0
    %v675 = vadd.f32 %v561, %v674
    %v676 = vpop.f32.mrb[0].mxu0
    %677 = vmatprep.mubr.f32.mxu0 0.0
    %678 = vmatmul.mubr.f32.gmra.mrb[0].mxu0 %v572
    %v679 = vpop.f32.mrb[0].mxu0
    %v680 = vadd.f32 %v561, %v679
    %v681 = vpop.f32.mrb[0].mxu0
    %682 = vmatprep.mubr.f32.mxu0 0.0
    %683 = vmatmul.mubr.f32.gmra.mrb[0].mxu0 %v575
    %v684 = vpop.f32.mrb[0].mxu0
    %v685 = vadd.f32 %v561, %v684
    %v686 = vpop.f32.mrb[0].mxu0
    %687 = vmatprep.mubr.f32.mxu0 0.0
    %688 = vmatmul.mubr.f32.gmra.mrb[0].mxu0 %v578
    %v689 = vpop.f32.mrb[0].mxu0
    %v690 = vadd.f32 %v561, %v689
    %v691 = vpop.f32.mrb[0].mxu0
    %692 = vmatprep.mubr.f32.mxu0 0.0
    %693 = vmatmul.mubr.f32.gmra.mrb[0].mxu0 %v581
    %v694 = vpop.f32.mrb[0].mxu0
    %v695 = vadd.f32 %v561, %v694
    %v696 = vpop.f32.mrb[0].mxu0
    %697 = vmatprep.mubr.f32.mxu0 0.0
    %698 = vmatmul.mubr.f32.gmra.mrb[0].mxu0 %v584
    %v699 = vpop.f32.mrb[0].mxu0
    %v700 = vadd.f32 %v561, %v699
    %v701 = vpop.f32.mrb[0].mxu0
    %702 = vmatprep.mubr.f32.mxu0 0.0
    %703 = vmatmul.mubr.f32.gmra.mrb[0].mxu0 %v587
    %v704 = vpop.f32.mrb[0].mxu0
    %v705 = vadd.f32 %v561, %v704
    %v706 = vpop.f32.mrb[0].mxu0
    %707 = vmatprep.mubr.f32.mxu0 0.0
    %708 = vmatmul.mubr.f32.gmra.mrb[0].mxu0 %v590
    %v709 = vpop.f32.mrb[0].mxu0
    %v710 = vadd.f32 %v561, %v709
    %v711 = vpop.f32.mrb[0].mxu0
    %712 = vmatprep.mubr.f32.mxu0 0.0
    %713 = vmatmul.mubr.f32.gmra.mrb[0].mxu0 %v593
    %v714 = vpop.f32.mrb[0].mxu0
    %v715 = vadd.f32 %v561, %v714
    %v716 = vpop.f32.mrb[0].mxu0
    %717 = vmatprep.mubr.f32.mxu0 0.0
    %718 = vmatmul.mubr.f32.gmra.mrb[0].mxu0 %v596
    %v719 = vpop.f32.mrb[0].mxu0
    %v720 = vadd.f32 %v561, %v719
    %v721 = vpop.f32.mrb[0].mxu0
    %722 = vdwg.mxu0
    %vm723 = vcmp.ge.f32.partialorder %v665, 0.0
    %vm724 = vcmp.ge.f32.partialorder %v670, 0.0
    %vm725 = vcmp.ge.f32.partialorder %v675, 0.0
    %vm726 = vcmp.ge.f32.partialorder %v680, 0.0
    %vm727 = vcmp.ge.f32.partialorder %v685, 0.0
    %vm728 = vcmp.ge.f32.partialorder %v690, 0.0
    %vm729 = vcmp.ge.f32.partialorder %v695, 0.0
    %vm730 = vcmp.ge.f32.partialorder %v700, 0.0
    %vm731 = vcmp.ge.f32.partialorder %v705, 0.0
    %vm732 = vcmp.ge.f32.partialorder %v710, 0.0
    %vm733 = vcmp.ge.f32.partialorder %v715, 0.0
    %vm734 = vcmp.ge.f32.partialorder %v720, 0.0
    %v735 = vmul.f32 %v665, 0.1
    %v736 = vmul.f32 %v670, 0.1
    %v737 = vmul.f32 %v675, 0.1
    %v738 = vmul.f32 %v680, 0.1
    %v739 = vmul.f32 %v685, 0.1
    %v740 = vmul.f32 %v690, 0.1
    %v741 = vmul.f32 %v695, 0.1
    %v742 = vmul.f32 %v700, 0.1
    %v743 = vmul.f32 %v705, 0.1
    %v744 = vmul.f32 %v710, 0.1
    %v745 = vmul.f32 %v715, 0.1
    %v746 = vmul.f32 %v720, 0.1
    %v747 = vsel %vm723, %v665, %v735
    %v748 = vsel %vm724, %v670, %v736
    %v749 = vsel %vm725, %v675, %v737
    %v750 = vsel %vm726, %v680, %v738
    %v751 = vsel %vm727, %v685, %v739
    %v752 = vsel %vm728, %v690, %v740
    %v753 = vsel %vm729, %v695, %v741
    %v754 = vsel %vm730, %v700, %v742
    %v755 = vsel %vm731, %v705, %v743
    %v756 = vsel %vm732, %v710, %v744
    %v757 = vsel %vm733, %v715, %v745
    %v758 = vsel %vm734, %v720, %v746
    %v759 = vld [vmem:[%s7] sm:$0xff]
    %v760 = vld [vmem:[%s7 + $0x8] sm:$0xff]
    %v761 = vld [vmem:[%s12 + $0x2] sm:$0x1]
    %v762 = vlaneseq
    %v763 = vshrl.u32 %v762, 7
    %v764 = vsub.s32 0, %v763
    %v765 = vrot.slane %v761, %v764
    %v767 = vsel %vm357, %v747, 0
    %v770 = vsel %vm357, %v748, 0
    %v773 = vsel %vm357, %v749, 0
    %v776 = vsel %vm357, %v750, 0
    %v779 = vsel %vm357, %v751, 0
    %v782 = vsel %vm357, %v752, 0
    %v785 = vsel %vm357, %v753, 0
    %v788 = vsel %vm357, %v754, 0
    %v791 = vsel %vm357, %v755, 0
    %v794 = vsel %vm357, %v756, 0
    %v797 = vsel %vm357, %v757, 0
    %v800 = vsel %vm357, %v758, 0
    %802 = vmatprep.subr.mxu0 0.0
    %803 = vmatpush1.msra.mxu0 %v759
    %804 = vmatprep.subr.mxu0 0.0
    %805 = vmatpush1.msra.mxu0 %v760
    %806 = vmatprep.subr.mxu0 0.0
    %807 = vmatpush1.msra.mxu0 0.0
    %808 = vmatprep.subr.mxu0 0.0
    %809 = vmatpush1.msra.mxu0 0.0
    %810 = vmatprep.subr.mxu0 0.0
    %811 = vmatpush1.msra.mxu0 0.0
    %812 = vmatprep.subr.mxu0 0.0
    %813 = vmatpush1.msra.mxu0 0.0
    %814 = vmatprep.subr.mxu0 0.0
    %815 = vmatpush1.msra.mxu0 0.0
    %816 = vmatprep.subr.mxu0 0.0
    %817 = vmatpush1.msra.mxu0 0.0
    %818 = vmatprep.subr.mxu0 0.0
    %819 = vmatpush1.msra.mxu0 0.0
    %820 = vmatprep.subr.mxu0 0.0
    %821 = vmatpush1.msra.mxu0 0.0
    %822 = vmatprep.subr.mxu0 0.0
    %823 = vmatpush1.msra.mxu0 0.0
    %824 = vmatprep.subr.mxu0 0.0
    %825 = vmatpush1.msra.mxu0 0.0
    %826 = vmatprep.subr.mxu0 0.0
    %827 = vmatpush1.msra.mxu0 0.0
    %828 = vmatprep.subr.mxu0 0.0
    %829 = vmatpush1.msra.mxu0 0.0
    %830 = vmatprep.subr.mxu0 0.0
    %831 = vmatpush1.msra.mxu0 0.0
    %832 = vmatprep.subr.mxu0 0.0
    %833 = vmatpush1.msra.mxu0 0.0
    %834 = vmatprep.subr.mxu0 0.0
    %835 = vmatpush1.msra.mxu0 0.0
    %836 = vmatprep.subr.mxu0 0.0
    %837 = vmatpush1.msra.mxu0 0.0
    %838 = vmatprep.subr.mxu0 0.0
    %839 = vmatpush1.msra.mxu0 0.0
    %840 = vmatprep.subr.mxu0 0.0
    %841 = vmatpush1.msra.mxu0 0.0
    %842 = vmatprep.subr.mxu0 0.0
    %843 = vmatpush1.msra.mxu0 0.0
    %844 = vmatprep.subr.mxu0 0.0
    %845 = vmatpush1.msra.mxu0 0.0
    %846 = vmatprep.subr.mxu0 0.0
    %847 = vmatpush1.msra.mxu0 0.0
    %848 = vmatprep.subr.mxu0 0.0
    %849 = vmatpush1.msra.mxu0 0.0
    %850 = vmatprep.subr.mxu0 0.0
    %851 = vmatpush1.msra.mxu0 0.0
    %852 = vmatprep.subr.mxu0 0.0
    %853 = vmatpush1.msra.mxu0 0.0
    %854 = vmatprep.subr.mxu0 0.0
    %855 = vmatpush1.msra.mxu0 0.0
    %856 = vmatprep.subr.mxu0 0.0
    %857 = vmatpush1.msra.mxu0 0.0
    %858 = vmatprep.subr.mxu0 0.0
    %859 = vmatpush1.msra.mxu0 0.0
    %860 = vmatprep.subr.mxu0 0.0
    %861 = vmatpush1.msra.mxu0 0.0
    %862 = vmatprep.subr.mxu0 0.0
    %863 = vmatpush1.msra.mxu0 0.0
    %864 = vmatprep.subr.mxu0 0.0
    %865 = vmatpush1.msra.mxu0 0.0
    %866 = vmatprep.mubr.f32.mxu0 0.0
    %867 = vmatmul.mubr.f32.gmra.mrb[0].mxu0 %v767
    %v868 = vpop.f32.mrb[0].mxu0
    %v869 = vadd.f32 %v765, %v868
    %v870 = vpop.f32.mrb[0].mxu0
    %871 = vmatprep.mubr.f32.mxu0 0.0
    %872 = vmatmul.mubr.f32.gmra.mrb[0].mxu0 %v770
    %v873 = vpop.f32.mrb[0].mxu0
    %v874 = vadd.f32 %v765, %v873
    %v875 = vpop.f32.mrb[0].mxu0
    %876 = vmatprep.mubr.f32.mxu0 0.0
    %877 = vmatmul.mubr.f32.gmra.mrb[0].mxu0 %v773
    %v878 = vpop.f32.mrb[0].mxu0
    %v879 = vadd.f32 %v765, %v878
    %v880 = vpop.f32.mrb[0].mxu0
    %881 = vmatprep.mubr.f32.mxu0 0.0
    %882 = vmatmul.mubr.f32.gmra.mrb[0].mxu0 %v776
    %v883 = vpop.f32.mrb[0].mxu0
    %v884 = vadd.f32 %v765, %v883
    %v885 = vpop.f32.mrb[0].mxu0
    %886 = vmatprep.mubr.f32.mxu0 0.0
    %887 = vmatmul.mubr.f32.gmra.mrb[0].mxu0 %v779
    %v888 = vpop.f32.mrb[0].mxu0
    %v889 = vadd.f32 %v765, %v888
    %v890 = vpop.f32.mrb[0].mxu0
    %891 = vmatprep.mubr.f32.mxu0 0.0
    %892 = vmatmul.mubr.f32.gmra.mrb[0].mxu0 %v782
    %v893 = vpop.f32.mrb[0].mxu0
    %v894 = vadd.f32 %v765, %v893
    %v895 = vpop.f32.mrb[0].mxu0
    %896 = vmatprep.mubr.f32.mxu0 0.0
    %897 = vmatmul.mubr.f32.gmra.mrb[0].mxu0 %v785
    %v898 = vpop.f32.mrb[0].mxu0
    %v899 = vadd.f32 %v765, %v898
    %v900 = vpop.f32.mrb[0].mxu0
    %901 = vmatprep.mubr.f32.mxu0 0.0
    %902 = vmatmul.mubr.f32.gmra.mrb[0].mxu0 %v788
    %v903 = vpop.f32.mrb[0].mxu0
    %v904 = vadd.f32 %v765, %v903
    %v905 = vpop.f32.mrb[0].mxu0
    %906 = vmatprep.mubr.f32.mxu0 0.0
    %907 = vmatmul.mubr.f32.gmra.mrb[0].mxu0 %v791
    %v908 = vpop.f32.mrb[0].mxu0
    %v909 = vadd.f32 %v765, %v908
    %v910 = vpop.f32.mrb[0].mxu0
    %911 = vmatprep.mubr.f32.mxu0 0.0
    %912 = vmatmul.mubr.f32.gmra.mrb[0].mxu0 %v794
    %v913 = vpop.f32.mrb[0].mxu0
    %v914 = vadd.f32 %v765, %v913
    %v915 = vpop.f32.mrb[0].mxu0
    %916 = vmatprep.mubr.f32.mxu0 0.0
    %917 = vmatmul.mubr.f32.gmra.mrb[0].mxu0 %v797
    %v918 = vpop.f32.mrb[0].mxu0
    %v919 = vadd.f32 %v765, %v918
    %v920 = vpop.f32.mrb[0].mxu0
    %921 = vmatprep.mubr.f32.mxu0 0.0
    %922 = vmatmul.mubr.f32.gmra.mrb[0].mxu0 %v800
    %v923 = vpop.f32.mrb[0].mxu0
    %v924 = vadd.f32 %v765, %v923
    %v925 = vpop.f32.mrb[0].mxu0
    %926 = vdwg.mxu0
    %vm927 = vcmp.ge.f32.partialorder %v869, 0.0
    %vm928 = vcmp.ge.f32.partialorder %v874, 0.0
    %vm929 = vcmp.ge.f32.partialorder %v879, 0.0
    %vm930 = vcmp.ge.f32.partialorder %v884, 0.0
    %vm931 = vcmp.ge.f32.partialorder %v889, 0.0
    %vm932 = vcmp.ge.f32.partialorder %v894, 0.0
    %vm933 = vcmp.ge.f32.partialorder %v899, 0.0
    %vm934 = vcmp.ge.f32.partialorder %v904, 0.0
    %vm935 = vcmp.ge.f32.partialorder %v909, 0.0
    %vm936 = vcmp.ge.f32.partialorder %v914, 0.0
    %vm937 = vcmp.ge.f32.partialorder %v919, 0.0
    %vm938 = vcmp.ge.f32.partialorder %v924, 0.0
    %v939 = vmul.f32 %v869, 0.1
    %v940 = vmul.f32 %v874, 0.1
    %v941 = vmul.f32 %v879, 0.1
    %v942 = vmul.f32 %v884, 0.1
    %v943 = vmul.f32 %v889, 0.1
    %v944 = vmul.f32 %v894, 0.1
    %v945 = vmul.f32 %v899, 0.1
    %v946 = vmul.f32 %v904, 0.1
    %v947 = vmul.f32 %v909, 0.1
    %v948 = vmul.f32 %v914, 0.1
    %v949 = vmul.f32 %v919, 0.1
    %v950 = vmul.f32 %v924, 0.1
    %v951 = vsel %vm927, %v869, %v939
    %v952 = vsel %vm928, %v874, %v940
    %v953 = vsel %vm929, %v879, %v941
    %v954 = vsel %vm930, %v884, %v942
    %v955 = vsel %vm931, %v889, %v943
    %v956 = vsel %vm932, %v894, %v944
    %v957 = vsel %vm933, %v899, %v945
    %v958 = vsel %vm934, %v904, %v946
    %v959 = vsel %vm935, %v909, %v947
    %v960 = vsel %vm936, %v914, %v948
    %v961 = vsel %vm937, %v919, %v949
    %v962 = vsel %vm938, %v924, %v950
    %v963 = vld [vmem:[%s8] sm:$0xff]
    %v964 = vld [vmem:[%s8 + $0x8] sm:$0xff]
    %v965 = vld [vmem:[%s12 + $0x3] sm:$0x1]
    %v966 = vlaneseq
    %v967 = vshrl.u32 %v966, 7
    %v968 = vsub.s32 0, %v967
    %v969 = vrot.slane %v965, %v968
    %v971 = vsel %vm357, %v951, 0
    %v974 = vsel %vm357, %v952, 0
    %v977 = vsel %vm357, %v953, 0
    %v980 = vsel %vm357, %v954, 0
    %v983 = vsel %vm357, %v955, 0
    %v986 = vsel %vm357, %v956, 0
    %v989 = vsel %vm357, %v957, 0
    %v992 = vsel %vm357, %v958, 0
    %v995 = vsel %vm357, %v959, 0
    %v998 = vsel %vm357, %v960, 0
    %v1001 = vsel %vm357, %v961, 0
    %v1004 = vsel %vm357, %v962, 0
    %1006 = vmatprep.subr.mxu0 0.0
    %1007 = vmatpush1.msra.mxu0 %v963
    %1008 = vmatprep.subr.mxu0 0.0
    %1009 = vmatpush1.msra.mxu0 %v964
    %1010 = vmatprep.subr.mxu0 0.0
    %1011 = vmatpush1.msra.mxu0 0.0
    %1012 = vmatprep.subr.mxu0 0.0
    %1013 = vmatpush1.msra.mxu0 0.0
    %1014 = vmatprep.subr.mxu0 0.0
    %1015 = vmatpush1.msra.mxu0 0.0
    %1016 = vmatprep.subr.mxu0 0.0
    %1017 = vmatpush1.msra.mxu0 0.0
    %1018 = vmatprep.subr.mxu0 0.0
    %1019 = vmatpush1.msra.mxu0 0.0
    %1020 = vmatprep.subr.mxu0 0.0
    %1021 = vmatpush1.msra.mxu0 0.0
    %1022 = vmatprep.subr.mxu0 0.0
    %1023 = vmatpush1.msra.mxu0 0.0
    %1024 = vmatprep.subr.mxu0 0.0
    %1025 = vmatpush1.msra.mxu0 0.0
    %1026 = vmatprep.subr.mxu0 0.0
    %1027 = vmatpush1.msra.mxu0 0.0
    %1028 = vmatprep.subr.mxu0 0.0
    %1029 = vmatpush1.msra.mxu0 0.0
    %1030 = vmatprep.subr.mxu0 0.0
    %1031 = vmatpush1.msra.mxu0 0.0
    %1032 = vmatprep.subr.mxu0 0.0
    %1033 = vmatpush1.msra.mxu0 0.0
    %1034 = vmatprep.subr.mxu0 0.0
    %1035 = vmatpush1.msra.mxu0 0.0
    %1036 = vmatprep.subr.mxu0 0.0
    %1037 = vmatpush1.msra.mxu0 0.0
    %1038 = vmatprep.subr.mxu0 0.0
    %1039 = vmatpush1.msra.mxu0 0.0
    %1040 = vmatprep.subr.mxu0 0.0
    %1041 = vmatpush1.msra.mxu0 0.0
    %1042 = vmatprep.subr.mxu0 0.0
    %1043 = vmatpush1.msra.mxu0 0.0
    %1044 = vmatprep.subr.mxu0 0.0
    %1045 = vmatpush1.msra.mxu0 0.0
    %1046 = vmatprep.subr.mxu0 0.0
    %1047 = vmatpush1.msra.mxu0 0.0
    %1048 = vmatprep.subr.mxu0 0.0
    %1049 = vmatpush1.msra.mxu0 0.0
    %1050 = vmatprep.subr.mxu0 0.0
    %1051 = vmatpush1.msra.mxu0 0.0
    %1052 = vmatprep.subr.mxu0 0.0
    %1053 = vmatpush1.msra.mxu0 0.0
    %1054 = vmatprep.subr.mxu0 0.0
    %1055 = vmatpush1.msra.mxu0 0.0
    %1056 = vmatprep.subr.mxu0 0.0
    %1057 = vmatpush1.msra.mxu0 0.0
    %1058 = vmatprep.subr.mxu0 0.0
    %1059 = vmatpush1.msra.mxu0 0.0
    %1060 = vmatprep.subr.mxu0 0.0
    %1061 = vmatpush1.msra.mxu0 0.0
    %1062 = vmatprep.subr.mxu0 0.0
    %1063 = vmatpush1.msra.mxu0 0.0
    %1064 = vmatprep.subr.mxu0 0.0
    %1065 = vmatpush1.msra.mxu0 0.0
    %1066 = vmatprep.subr.mxu0 0.0
    %1067 = vmatpush1.msra.mxu0 0.0
    %1068 = vmatprep.subr.mxu0 0.0
    %1069 = vmatpush1.msra.mxu0 0.0
    %1070 = vmatprep.mubr.f32.mxu0 0.0
    %1071 = vmatmul.mubr.f32.gmra.mrb[0].mxu0 %v971
    %v1072 = vpop.f32.mrb[0].mxu0
    %v1073 = vadd.f32 %v969, %v1072
    %v1074 = vpop.f32.mrb[0].mxu0
    %1075 = vmatprep.mubr.f32.mxu0 0.0
    %1076 = vmatmul.mubr.f32.gmra.mrb[0].mxu0 %v974
    %v1077 = vpop.f32.mrb[0].mxu0
    %v1078 = vadd.f32 %v969, %v1077
    %v1079 = vpop.f32.mrb[0].mxu0
    %1080 = vmatprep.mubr.f32.mxu0 0.0
    %1081 = vmatmul.mubr.f32.gmra.mrb[0].mxu0 %v977
    %v1082 = vpop.f32.mrb[0].mxu0
    %v1083 = vadd.f32 %v969, %v1082
    %v1084 = vpop.f32.mrb[0].mxu0
    %1085 = vmatprep.mubr.f32.mxu0 0.0
    %1086 = vmatmul.mubr.f32.gmra.mrb[0].mxu0 %v980
    %v1087 = vpop.f32.mrb[0].mxu0
    %v1088 = vadd.f32 %v969, %v1087
    %v1089 = vpop.f32.mrb[0].mxu0
    %1090 = vmatprep.mubr.f32.mxu0 0.0
    %1091 = vmatmul.mubr.f32.gmra.mrb[0].mxu0 %v983
    %v1092 = vpop.f32.mrb[0].mxu0
    %v1093 = vadd.f32 %v969, %v1092
    %v1094 = vpop.f32.mrb[0].mxu0
    %1095 = vmatprep.mubr.f32.mxu0 0.0
    %1096 = vmatmul.mubr.f32.gmra.mrb[0].mxu0 %v986
    %v1097 = vpop.f32.mrb[0].mxu0
    %v1098 = vadd.f32 %v969, %v1097
    %v1099 = vpop.f32.mrb[0].mxu0
    %1100 = vmatprep.mubr.f32.mxu0 0.0
    %1101 = vmatmul.mubr.f32.gmra.mrb[0].mxu0 %v989
    %v1102 = vpop.f32.mrb[0].mxu0
    %v1103 = vadd.f32 %v969, %v1102
    %v1104 = vpop.f32.mrb[0].mxu0
    %1105 = vmatprep.mubr.f32.mxu0 0.0
    %1106 = vmatmul.mubr.f32.gmra.mrb[0].mxu0 %v992
    %v1107 = vpop.f32.mrb[0].mxu0
    %v1108 = vadd.f32 %v969, %v1107
    %v1109 = vpop.f32.mrb[0].mxu0
    %1110 = vmatprep.mubr.f32.mxu0 0.0
    %1111 = vmatmul.mubr.f32.gmra.mrb[0].mxu0 %v995
    %v1112 = vpop.f32.mrb[0].mxu0
    %v1113 = vadd.f32 %v969, %v1112
    %v1114 = vpop.f32.mrb[0].mxu0
    %1115 = vmatprep.mubr.f32.mxu0 0.0
    %1116 = vmatmul.mubr.f32.gmra.mrb[0].mxu0 %v998
    %v1117 = vpop.f32.mrb[0].mxu0
    %v1118 = vadd.f32 %v969, %v1117
    %v1119 = vpop.f32.mrb[0].mxu0
    %1120 = vmatprep.mubr.f32.mxu0 0.0
    %1121 = vmatmul.mubr.f32.gmra.mrb[0].mxu0 %v1001
    %v1122 = vpop.f32.mrb[0].mxu0
    %v1123 = vadd.f32 %v969, %v1122
    %v1124 = vpop.f32.mrb[0].mxu0
    %1125 = vmatprep.mubr.f32.mxu0 0.0
    %1126 = vmatmul.mubr.f32.gmra.mrb[0].mxu0 %v1004
    %v1127 = vpop.f32.mrb[0].mxu0
    %v1128 = vadd.f32 %v969, %v1127
    %v1129 = vpop.f32.mrb[0].mxu0
    %1130 = vdwg.mxu0
    %vm1131 = vcmp.ge.f32.partialorder %v1073, 0.0
    %vm1132 = vcmp.ge.f32.partialorder %v1078, 0.0
    %vm1133 = vcmp.ge.f32.partialorder %v1083, 0.0
    %vm1134 = vcmp.ge.f32.partialorder %v1088, 0.0
    %vm1135 = vcmp.ge.f32.partialorder %v1093, 0.0
    %vm1136 = vcmp.ge.f32.partialorder %v1098, 0.0
    %vm1137 = vcmp.ge.f32.partialorder %v1103, 0.0
    %vm1138 = vcmp.ge.f32.partialorder %v1108, 0.0
    %vm1139 = vcmp.ge.f32.partialorder %v1113, 0.0
    %vm1140 = vcmp.ge.f32.partialorder %v1118, 0.0
    %vm1141 = vcmp.ge.f32.partialorder %v1123, 0.0
    %vm1142 = vcmp.ge.f32.partialorder %v1128, 0.0
    %v1143 = vmul.f32 %v1073, 0.1
    %v1144 = vmul.f32 %v1078, 0.1
    %v1145 = vmul.f32 %v1083, 0.1
    %v1146 = vmul.f32 %v1088, 0.1
    %v1147 = vmul.f32 %v1093, 0.1
    %v1148 = vmul.f32 %v1098, 0.1
    %v1149 = vmul.f32 %v1103, 0.1
    %v1150 = vmul.f32 %v1108, 0.1
    %v1151 = vmul.f32 %v1113, 0.1
    %v1152 = vmul.f32 %v1118, 0.1
    %v1153 = vmul.f32 %v1123, 0.1
    %v1154 = vmul.f32 %v1128, 0.1
    %v1155 = vsel %vm1131, %v1073, %v1143
    %v1156 = vsel %vm1132, %v1078, %v1144
    %v1157 = vsel %vm1133, %v1083, %v1145
    %v1158 = vsel %vm1134, %v1088, %v1146
    %v1159 = vsel %vm1135, %v1093, %v1147
    %v1160 = vsel %vm1136, %v1098, %v1148
    %v1161 = vsel %vm1137, %v1103, %v1149
    %v1162 = vsel %vm1138, %v1108, %v1150
    %v1163 = vsel %vm1139, %v1113, %v1151
    %v1164 = vsel %vm1140, %v1118, %v1152
    %v1165 = vsel %vm1141, %v1123, %v1153
    %v1166 = vsel %vm1142, %v1128, %v1154
    %v1167 = vld [vmem:[%s9] sm:$0xff]
    %v1168 = vld [vmem:[%s9 + $0x8] sm:$0xff]
    %v1169 = vld [vmem:[%s9 + $0x10] sm:$0xff]
    %v1170 = vld [vmem:[%s9 + $0x18] sm:$0xff]
    %v1171 = vld [vmem:[%s10] sm:$0xff]
    %v1172 = vld [vmem:[%s10 + $0x8] sm:$0xff]
    %v1173 = vld [vmem:[%s10 + $0x10] sm:$0xff]
    %v1174 = vld [vmem:[%s10 + $0x18] sm:$0xff]
    %vm1175 = vcmask 261120
    %v1177 = vsel %vm1175, %v1155, 0
    %v1180 = vsel %vm1175, %v1156, 0
    %v1183 = vsel %vm1175, %v1157, 0
    %v1186 = vsel %vm1175, %v1158, 0
    %v1189 = vsel %vm1175, %v1159, 0
    %v1192 = vsel %vm1175, %v1160, 0
    %v1195 = vsel %vm1175, %v1161, 0
    %v1198 = vsel %vm1175, %v1162, 0
    %v1201 = vsel %vm1175, %v1163, 0
    %v1204 = vsel %vm1175, %v1164, 0
    %v1207 = vsel %vm1175, %v1165, 0
    %v1210 = vsel %vm1175, %v1166, 0
    %1212 = vmatprep.subr.mxu0 0.0
    %1213 = vmatpush1.msra.mxu0 %v1171
    %1214 = vmatprep.subr.mxu0 0.0
    %1215 = vmatpush1.msra.mxu0 %v1172
    %1216 = vmatprep.subr.mxu0 0.0
    %1217 = vmatpush1.msra.mxu0 %v1173
    %1218 = vmatprep.subr.mxu0 0.0
    %1219 = vmatpush1.msra.mxu0 %v1174
    %1220 = vmatprep.subr.mxu0 0.0
    %1221 = vmatpush1.msra.mxu0 0.0
    %1222 = vmatprep.subr.mxu0 0.0
    %1223 = vmatpush1.msra.mxu0 0.0
    %1224 = vmatprep.subr.mxu0 0.0
    %1225 = vmatpush1.msra.mxu0 0.0
    %1226 = vmatprep.subr.mxu0 0.0
    %1227 = vmatpush1.msra.mxu0 0.0
    %1228 = vmatprep.subr.mxu0 0.0
    %1229 = vmatpush1.msra.mxu0 0.0
    %1230 = vmatprep.subr.mxu0 0.0
    %1231 = vmatpush1.msra.mxu0 0.0
    %1232 = vmatprep.subr.mxu0 0.0
    %1233 = vmatpush1.msra.mxu0 0.0
    %1234 = vmatprep.subr.mxu0 0.0
    %1235 = vmatpush1.msra.mxu0 0.0
    %1236 = vmatprep.subr.mxu0 0.0
    %1237 = vmatpush1.msra.mxu0 0.0
    %1238 = vmatprep.subr.mxu0 0.0
    %1239 = vmatpush1.msra.mxu0 0.0
    %1240 = vmatprep.subr.mxu0 0.0
    %1241 = vmatpush1.msra.mxu0 0.0
    %1242 = vmatprep.subr.mxu0 0.0
    %1243 = vmatpush1.msra.mxu0 0.0
    %1244 = vmatprep.subr.mxu0 0.0
    %1245 = vmatpush1.msra.mxu0 0.0
    %1246 = vmatprep.subr.mxu0 0.0
    %1247 = vmatpush1.msra.mxu0 0.0
    %1248 = vmatprep.subr.mxu0 0.0
    %1249 = vmatpush1.msra.mxu0 0.0
    %1250 = vmatprep.subr.mxu0 0.0
    %1251 = vmatpush1.msra.mxu0 0.0
    %1252 = vmatprep.subr.mxu0 0.0
    %1253 = vmatpush1.msra.mxu0 0.0
    %1254 = vmatprep.subr.mxu0 0.0
    %1255 = vmatpush1.msra.mxu0 0.0
    %1256 = vmatprep.subr.mxu0 0.0
    %1257 = vmatpush1.msra.mxu0 0.0
    %1258 = vmatprep.subr.mxu0 0.0
    %1259 = vmatpush1.msra.mxu0 0.0
    %1260 = vmatprep.subr.mxu0 0.0
    %1261 = vmatpush1.msra.mxu0 0.0
    %1262 = vmatprep.subr.mxu0 0.0
    %1263 = vmatpush1.msra.mxu0 0.0
    %1264 = vmatprep.subr.mxu0 0.0
    %1265 = vmatpush1.msra.mxu0 0.0
    %1266 = vmatprep.subr.mxu0 0.0
    %1267 = vmatpush1.msra.mxu0 0.0
    %1268 = vmatprep.subr.mxu0 0.0
    %1269 = vmatpush1.msra.mxu0 0.0
    %1270 = vmatprep.subr.mxu0 0.0
    %1271 = vmatpush1.msra.mxu0 0.0
    %1272 = vmatprep.subr.mxu0 0.0
    %1273 = vmatpush1.msra.mxu0 0.0
    %1274 = vmatprep.subr.mxu0 0.0
    %1275 = vmatpush1.msra.mxu0 0.0
    %1276 = vmatprep.mubr.f32.mxu0 0.0
    %1277 = vmatmul.mubr.f32.gmra.mrb[0].mxu0 %v1177
    %v1278 = vpop.f32.mrb[0].mxu0
    %v1279 = vadd.f32 0.0, %v1278
    %v1280 = vpop.f32.mrb[0].mxu0
    %1281 = vmatprep.mubr.f32.mxu0 0.0
    %1282 = vmatmul.mubr.f32.gmra.mrb[0].mxu0 %v1180
    %v1283 = vpop.f32.mrb[0].mxu0
    %v1284 = vadd.f32 0.0, %v1283
    %v1285 = vpop.f32.mrb[0].mxu0
    %1286 = vmatprep.mubr.f32.mxu0 0.0
    %1287 = vmatmul.mubr.f32.gmra.mrb[0].mxu0 %v1183
    %v1288 = vpop.f32.mrb[0].mxu0
    %v1289 = vadd.f32 0.0, %v1288
    %v1290 = vpop.f32.mrb[0].mxu0
    %1291 = vmatprep.mubr.f32.mxu0 0.0
    %1292 = vmatmul.mubr.f32.gmra.mrb[0].mxu0 %v1186
    %v1293 = vpop.f32.mrb[0].mxu0
    %v1294 = vadd.f32 0.0, %v1293
    %v1295 = vpop.f32.mrb[0].mxu0
    %1296 = vmatprep.mubr.f32.mxu0 0.0
    %1297 = vmatmul.mubr.f32.gmra.mrb[0].mxu0 %v1189
    %v1298 = vpop.f32.mrb[0].mxu0
    %v1299 = vadd.f32 0.0, %v1298
    %v1300 = vpop.f32.mrb[0].mxu0
    %1301 = vmatprep.mubr.f32.mxu0 0.0
    %1302 = vmatmul.mubr.f32.gmra.mrb[0].mxu0 %v1192
    %v1303 = vpop.f32.mrb[0].mxu0
    %v1304 = vadd.f32 0.0, %v1303
    %v1305 = vpop.f32.mrb[0].mxu0
    %1306 = vmatprep.mubr.f32.mxu0 0.0
    %1307 = vmatmul.mubr.f32.gmra.mrb[0].mxu0 %v1195
    %v1308 = vpop.f32.mrb[0].mxu0
    %v1309 = vadd.f32 0.0, %v1308
    %v1310 = vpop.f32.mrb[0].mxu0
    %1311 = vmatprep.mubr.f32.mxu0 0.0
    %1312 = vmatmul.mubr.f32.gmra.mrb[0].mxu0 %v1198
    %v1313 = vpop.f32.mrb[0].mxu0
    %v1314 = vadd.f32 0.0, %v1313
    %v1315 = vpop.f32.mrb[0].mxu0
    %1316 = vmatprep.mubr.f32.mxu0 0.0
    %1317 = vmatmul.mubr.f32.gmra.mrb[0].mxu0 %v1201
    %v1318 = vpop.f32.mrb[0].mxu0
    %v1319 = vadd.f32 0.0, %v1318
    %v1320 = vpop.f32.mrb[0].mxu0
    %1321 = vmatprep.mubr.f32.mxu0 0.0
    %1322 = vmatmul.mubr.f32.gmra.mrb[0].mxu0 %v1204
    %v1323 = vpop.f32.mrb[0].mxu0
    %v1324 = vadd.f32 0.0, %v1323
    %v1325 = vpop.f32.mrb[0].mxu0
    %1326 = vmatprep.mubr.f32.mxu0 0.0
    %1327 = vmatmul.mubr.f32.gmra.mrb[0].mxu0 %v1207
    %v1328 = vpop.f32.mrb[0].mxu0
    %v1329 = vadd.f32 0.0, %v1328
    %v1330 = vpop.f32.mrb[0].mxu0
    %1331 = vmatprep.mubr.f32.mxu0 0.0
    %1332 = vmatmul.mubr.f32.gmra.mrb[0].mxu0 %v1210
    %v1333 = vpop.f32.mrb[0].mxu0
    %v1334 = vadd.f32 0.0, %v1333
    %v1335 = vpop.f32.mrb[0].mxu0
    %1336 = vdwg.mxu0
    %v1337 = vlaneseq
    %v1338 = vand.u32 %v1337, 127
    %v1339 = vld [vmem:[%s2] sm:$0xff]
    %v1340 = vld [vmem:[%s2 + $0x8] sm:$0xff]
    %v1341 = vld [vmem:[%s2 + $0x10] sm:$0xff]
    %v1342 = vld [vmem:[%s2 + $0x18] sm:$0xff]
    %v1343 = vld [vmem:[%s2 + $0x20] sm:$0xff]
    %v1344 = vld [vmem:[%s2 + $0x28] sm:$0xff]
    %v1345 = vld [vmem:[%s2 + $0x30] sm:$0xff]
    %v1346 = vld [vmem:[%s2 + $0x38] sm:$0xff]
    %v1347 = vld [vmem:[%s2 + $0x40] sm:$0xff]
    %v1348 = vld [vmem:[%s2 + $0x48] sm:$0xff]
    %v1349 = vld [vmem:[%s2 + $0x50] sm:$0xff]
    %v1350 = vld [vmem:[%s2 + $0x58] sm:$0xff]
    %1351 = vset.pattern.permute.xlu0 0
    %1352 = vperm.xlu0 %1351, %v1339
    %v1353 = vpop.permute.xlu0 %1352
    %1354 = vset.pattern.permute.xlu0 0
    %1355 = vperm.xlu0 %1354, %v1340
    %v1356 = vpop.permute.xlu0 %1355
    %1357 = vset.pattern.permute.xlu0 0
    %1358 = vperm.xlu0 %1357, %v1341
    %v1359 = vpop.permute.xlu0 %1358
    %1360 = vset.pattern.permute.xlu0 0
    %1361 = vperm.xlu0 %1360, %v1342
    %v1362 = vpop.permute.xlu0 %1361
    %1363 = vset.pattern.permute.xlu0 0
    %1364 = vperm.xlu0 %1363, %v1343
    %v1365 = vpop.permute.xlu0 %1364
    %1366 = vset.pattern.permute.xlu0 0
    %1367 = vperm.xlu0 %1366, %v1344
    %v1368 = vpop.permute.xlu0 %1367
    %1369 = vset.pattern.permute.xlu0 0
    %1370 = vperm.xlu0 %1369, %v1345
    %v1371 = vpop.permute.xlu0 %1370
    %1372 = vset.pattern.permute.xlu0 0
    %1373 = vperm.xlu0 %1372, %v1346
    %v1374 = vpop.permute.xlu0 %1373
    %1375 = vset.pattern.permute.xlu0 0
    %1376 = vperm.xlu0 %1375, %v1347
    %v1377 = vpop.permute.xlu0 %1376
    %1378 = vset.pattern.permute.xlu0 0
    %1379 = vperm.xlu0 %1378, %v1348
    %v1380 = vpop.permute.xlu0 %1379
    %1381 = vset.pattern.permute.xlu0 0
    %1382 = vperm.xlu0 %1381, %v1349
    %v1383 = vpop.permute.xlu0 %1382
    %1384 = vset.pattern.permute.xlu0 0
    %1385 = vperm.xlu0 %1384, %v1350
    %v1386 = vpop.permute.xlu0 %1385
    %vm1387 = vcmp.eq.s32.totalorder %v1338, %v1353
    %vm1388 = vcmp.eq.s32.totalorder %v1338, %v1356
    %vm1389 = vcmp.eq.s32.totalorder %v1338, %v1359
    %vm1390 = vcmp.eq.s32.totalorder %v1338, %v1362
    %vm1391 = vcmp.eq.s32.totalorder %v1338, %v1365
    %vm1392 = vcmp.eq.s32.totalorder %v1338, %v1368
    %vm1393 = vcmp.eq.s32.totalorder %v1338, %v1371
    %vm1394 = vcmp.eq.s32.totalorder %v1338, %v1374
    %vm1395 = vcmp.eq.s32.totalorder %v1338, %v1377
    %vm1396 = vcmp.eq.s32.totalorder %v1338, %v1380
    %vm1397 = vcmp.eq.s32.totalorder %v1338, %v1383
    %vm1398 = vcmp.eq.s32.totalorder %v1338, %v1386
    %v1399 = vsel %vm1387, 1, 0
    %v1400 = vsel %vm1388, 1, 0
    %v1401 = vsel %vm1389, 1, 0
    %v1402 = vsel %vm1390, 1, 0
    %v1403 = vsel %vm1391, 1, 0
    %v1404 = vsel %vm1392, 1, 0
    %v1405 = vsel %vm1393, 1, 0
    %v1406 = vsel %vm1394, 1, 0
    %v1407 = vsel %vm1395, 1, 0
    %v1408 = vsel %vm1396, 1, 0
    %v1409 = vsel %vm1397, 1, 0
    %v1410 = vsel %vm1398, 1, 0
    %v1411 = vcvt.s32.f32 %v1399
    %v1412 = vcvt.s32.f32 %v1400
    %v1413 = vcvt.s32.f32 %v1401
    %v1414 = vcvt.s32.f32 %v1402
    %v1415 = vcvt.s32.f32 %v1403
    %v1416 = vcvt.s32.f32 %v1404
    %v1417 = vcvt.s32.f32 %v1405
    %v1418 = vcvt.s32.f32 %v1406
    %v1419 = vcvt.s32.f32 %v1407
    %v1420 = vcvt.s32.f32 %v1408
    %v1421 = vcvt.s32.f32 %v1409
    %v1422 = vcvt.s32.f32 %v1410
    %v1424 = vsel %vm116, %v1411, 0
    %v1427 = vsel %vm116, %v1412, 0
    %v1430 = vsel %vm116, %v1413, 0
    %v1433 = vsel %vm116, %v1414, 0
    %v1436 = vsel %vm116, %v1415, 0
    %v1439 = vsel %vm116, %v1416, 0
    %v1442 = vsel %vm116, %v1417, 0
    %v1445 = vsel %vm116, %v1418, 0
    %v1448 = vsel %vm116, %v1419, 0
    %v1451 = vsel %vm116, %v1420, 0
    %v1454 = vsel %vm116, %v1421, 0
    %v1457 = vsel %vm116, %v1422, 0
    %1459 = vmatprep.subr.mxu0 0.0
    %1460 = vmatpush1.msra.mxu0 %v1279
    %1461 = vmatprep.subr.mxu0 0.0
    %1462 = vmatpush1.msra.mxu0 %v1284
    %1463 = vmatprep.subr.mxu0 0.0
    %1464 = vmatpush1.msra.mxu0 %v1289
    %1465 = vmatprep.subr.mxu0 0.0
    %1466 = vmatpush1.msra.mxu0 %v1294
    %1467 = vmatprep.subr.mxu0 0.0
    %1468 = vmatpush1.msra.mxu0 %v1299
    %1469 = vmatprep.subr.mxu0 0.0
    %1470 = vmatpush1.msra.mxu0 %v1304
    %1471 = vmatprep.subr.mxu0 0.0
    %1472 = vmatpush1.msra.mxu0 %v1309
    %1473 = vmatprep.subr.mxu0 0.0
    %1474 = vmatpush1.msra.mxu0 %v1314
    %1475 = vmatprep.subr.mxu0 0.0
    %1476 = vmatpush1.msra.mxu0 %v1319
    %1477 = vmatprep.subr.mxu0 0.0
    %1478 = vmatpush1.msra.mxu0 %v1324
    %1479 = vmatprep.subr.mxu0 0.0
    %1480 = vmatpush1.msra.mxu0 %v1329
    %1481 = vmatprep.subr.mxu0 0.0
    %1482 = vmatpush1.msra.mxu0 %v1334
    %1483 = vmatprep.subr.mxu0 0.0
    %1484 = vmatpush1.msra.mxu0 0.0
    %1485 = vmatprep.subr.mxu0 0.0
    %1486 = vmatpush1.msra.mxu0 0.0
    %1487 = vmatprep.subr.mxu0 0.0
    %1488 = vmatpush1.msra.mxu0 0.0
    %1489 = vmatprep.subr.mxu0 0.0
    %1490 = vmatpush1.msra.mxu0 0.0
    %1491 = vmatprep.subr.mxu0 0.0
    %1492 = vmatpush1.msra.mxu0 0.0
    %1493 = vmatprep.subr.mxu0 0.0
    %1494 = vmatpush1.msra.mxu0 0.0
    %1495 = vmatprep.subr.mxu0 0.0
    %1496 = vmatpush1.msra.mxu0 0.0
    %1497 = vmatprep.subr.mxu0 0.0
    %1498 = vmatpush1.msra.mxu0 0.0
    %1499 = vmatprep.subr.mxu0 0.0
    %1500 = vmatpush1.msra.mxu0 0.0
    %1501 = vmatprep.subr.mxu0 0.0
    %1502 = vmatpush1.msra.mxu0 0.0
    %1503 = vmatprep.subr.mxu0 0.0
    %1504 = vmatpush1.msra.mxu0 0.0
    %1505 = vmatprep.subr.mxu0 0.0
    %1506 = vmatpush1.msra.mxu0 0.0
    %1507 = vmatprep.subr.mxu0 0.0
    %1508 = vmatpush1.msra.mxu0 0.0
    %1509 = vmatprep.subr.mxu0 0.0
    %1510 = vmatpush1.msra.mxu0 0.0
    %1511 = vmatprep.subr.mxu0 0.0
    %1512 = vmatpush1.msra.mxu0 0.0
    %1513 = vmatprep.subr.mxu0 0.0
    %1514 = vmatpush1.msra.mxu0 0.0
    %1515 = vmatprep.subr.mxu0 0.0
    %1516 = vmatpush1.msra.mxu0 0.0
    %1517 = vmatprep.subr.mxu0 0.0
    %1518 = vmatpush1.msra.mxu0 0.0
    %1519 = vmatprep.subr.mxu0 0.0
    %1520 = vmatpush1.msra.mxu0 0.0
    %1521 = vmatprep.subr.mxu0 0.0
    %1522 = vmatpush1.msra.mxu0 0.0
    %1523 = vmatprep.mubr.f32.mxu0 0.0
    %1524 = vmatmul.mubr.f32.gmra.mrb[0].mxu0 %v1424
    %v1525 = vpop.f32.mrb[0].mxu0
    %v1526 = vadd.f32 0.0, %v1525
    %v1527 = vpop.f32.mrb[0].mxu0
    %1528 = vmatprep.mubr.f32.mxu0 0.0
    %1529 = vmatmul.mubr.f32.gmra.mrb[0].mxu0 %v1427
    %v1530 = vpop.f32.mrb[0].mxu0
    %v1531 = vadd.f32 0.0, %v1530
    %v1532 = vpop.f32.mrb[0].mxu0
    %1533 = vmatprep.mubr.f32.mxu0 0.0
    %1534 = vmatmul.mubr.f32.gmra.mrb[0].mxu0 %v1430
    %v1535 = vpop.f32.mrb[0].mxu0
    %v1536 = vadd.f32 0.0, %v1535
    %v1537 = vpop.f32.mrb[0].mxu0
    %1538 = vmatprep.mubr.f32.mxu0 0.0
    %1539 = vmatmul.mubr.f32.gmra.mrb[0].mxu0 %v1433
    %v1540 = vpop.f32.mrb[0].mxu0
    %v1541 = vadd.f32 0.0, %v1540
    %v1542 = vpop.f32.mrb[0].mxu0
    %1543 = vmatprep.mubr.f32.mxu0 0.0
    %1544 = vmatmul.mubr.f32.gmra.mrb[0].mxu0 %v1436
    %v1545 = vpop.f32.mrb[0].mxu0
    %v1546 = vadd.f32 0.0, %v1545
    %v1547 = vpop.f32.mrb[0].mxu0
    %1548 = vmatprep.mubr.f32.mxu0 0.0
    %1549 = vmatmul.mubr.f32.gmra.mrb[0].mxu0 %v1439
    %v1550 = vpop.f32.mrb[0].mxu0
    %v1551 = vadd.f32 0.0, %v1550
    %v1552 = vpop.f32.mrb[0].mxu0
    %1553 = vmatprep.mubr.f32.mxu0 0.0
    %1554 = vmatmul.mubr.f32.gmra.mrb[0].mxu0 %v1442
    %v1555 = vpop.f32.mrb[0].mxu0
    %v1556 = vadd.f32 0.0, %v1555
    %v1557 = vpop.f32.mrb[0].mxu0
    %1558 = vmatprep.mubr.f32.mxu0 0.0
    %1559 = vmatmul.mubr.f32.gmra.mrb[0].mxu0 %v1445
    %v1560 = vpop.f32.mrb[0].mxu0
    %v1561 = vadd.f32 0.0, %v1560
    %v1562 = vpop.f32.mrb[0].mxu0
    %1563 = vmatprep.mubr.f32.mxu0 0.0
    %1564 = vmatmul.mubr.f32.gmra.mrb[0].mxu0 %v1448
    %v1565 = vpop.f32.mrb[0].mxu0
    %v1566 = vadd.f32 0.0, %v1565
    %v1567 = vpop.f32.mrb[0].mxu0
    %1568 = vmatprep.mubr.f32.mxu0 0.0
    %1569 = vmatmul.mubr.f32.gmra.mrb[0].mxu0 %v1451
    %v1570 = vpop.f32.mrb[0].mxu0
    %v1571 = vadd.f32 0.0, %v1570
    %v1572 = vpop.f32.mrb[0].mxu0
    %1573 = vmatprep.mubr.f32.mxu0 0.0
    %1574 = vmatmul.mubr.f32.gmra.mrb[0].mxu0 %v1454
    %v1575 = vpop.f32.mrb[0].mxu0
    %v1576 = vadd.f32 0.0, %v1575
    %v1577 = vpop.f32.mrb[0].mxu0
    %1578 = vmatprep.mubr.f32.mxu0 0.0
    %1579 = vmatmul.mubr.f32.gmra.mrb[0].mxu0 %v1457
    %v1580 = vpop.f32.mrb[0].mxu0
    %v1581 = vadd.f32 0.0, %v1580
    %v1582 = vpop.f32.mrb[0].mxu0
    %1583 = vdwg.mxu0
    %v1585 = vsel %vm1175, %v543, 0
    %v1588 = vsel %vm1175, %v544, 0
    %v1591 = vsel %vm1175, %v545, 0
    %v1594 = vsel %vm1175, %v546, 0
    %v1597 = vsel %vm1175, %v547, 0
    %v1600 = vsel %vm1175, %v548, 0
    %v1603 = vsel %vm1175, %v549, 0
    %v1606 = vsel %vm1175, %v550, 0
    %v1609 = vsel %vm1175, %v551, 0
    %v1612 = vsel %vm1175, %v552, 0
    %v1615 = vsel %vm1175, %v553, 0
    %v1618 = vsel %vm1175, %v554, 0
    %1620 = vmatprep.subr.mxu0 0.0
    %1621 = vmatpush1.msra.mxu0 %v1167
    %1622 = vmatprep.subr.mxu0 0.0
    %1623 = vmatpush1.msra.mxu0 %v1168
    %1624 = vmatprep.subr.mxu0 0.0
    %1625 = vmatpush1.msra.mxu0 %v1169
    %1626 = vmatprep.subr.mxu0 0.0
    %1627 = vmatpush1.msra.mxu0 %v1170
    %1628 = vmatprep.subr.mxu0 0.0
    %1629 = vmatpush1.msra.mxu0 0.0
    %1630 = vmatprep.subr.mxu0 0.0
    %1631 = vmatpush1.msra.mxu0 0.0
    %1632 = vmatprep.subr.mxu0 0.0
    %1633 = vmatpush1.msra.mxu0 0.0
    %1634 = vmatprep.subr.mxu0 0.0
    %1635 = vmatpush1.msra.mxu0 0.0
    %1636 = vmatprep.subr.mxu0 0.0
    %1637 = vmatpush1.msra.mxu0 0.0
    %1638 = vmatprep.subr.mxu0 0.0
    %1639 = vmatpush1.msra.mxu0 0.0
    %1640 = vmatprep.subr.mxu0 0.0
    %1641 = vmatpush1.msra.mxu0 0.0
    %1642 = vmatprep.subr.mxu0 0.0
    %1643 = vmatpush1.msra.mxu0 0.0
    %1644 = vmatprep.subr.mxu0 0.0
    %1645 = vmatpush1.msra.mxu0 0.0
    %1646 = vmatprep.subr.mxu0 0.0
    %1647 = vmatpush1.msra.mxu0 0.0
    %1648 = vmatprep.subr.mxu0 0.0
    %1649 = vmatpush1.msra.mxu0 0.0
    %1650 = vmatprep.subr.mxu0 0.0
    %1651 = vmatpush1.msra.mxu0 0.0
    %1652 = vmatprep.subr.mxu0 0.0
    %1653 = vmatpush1.msra.mxu0 0.0
    %1654 = vmatprep.subr.mxu0 0.0
    %1655 = vmatpush1.msra.mxu0 0.0
    %1656 = vmatprep.subr.mxu0 0.0
    %1657 = vmatpush1.msra.mxu0 0.0
    %1658 = vmatprep.subr.mxu0 0.0
    %1659 = vmatpush1.msra.mxu0 0.0
    %1660 = vmatprep.subr.mxu0 0.0
    %1661 = vmatpush1.msra.mxu0 0.0
    %1662 = vmatprep.subr.mxu0 0.0
    %1663 = vmatpush1.msra.mxu0 0.0
    %1664 = vmatprep.subr.mxu0 0.0
    %1665 = vmatpush1.msra.mxu0 0.0
    %1666 = vmatprep.subr.mxu0 0.0
    %1667 = vmatpush1.msra.mxu0 0.0
    %1668 = vmatprep.subr.mxu0 0.0
    %1669 = vmatpush1.msra.mxu0 0.0
    %1670 = vmatprep.subr.mxu0 0.0
    %1671 = vmatpush1.msra.mxu0 0.0
    %1672 = vmatprep.subr.mxu0 0.0
    %1673 = vmatpush1.msra.mxu0 0.0
    %1674 = vmatprep.subr.mxu0 0.0
    %1675 = vmatpush1.msra.mxu0 0.0
    %1676 = vmatprep.subr.mxu0 0.0
    %1677 = vmatpush1.msra.mxu0 0.0
    %1678 = vmatprep.subr.mxu0 0.0
    %1679 = vmatpush1.msra.mxu0 0.0
    %1680 = vmatprep.subr.mxu0 0.0
    %1681 = vmatpush1.msra.mxu0 0.0
    %1682 = vmatprep.subr.mxu0 0.0
    %1683 = vmatpush1.msra.mxu0 0.0
    %1684 = vmatprep.mubr.f32.mxu0 0.0
    %1685 = vmatmul.mubr.f32.gmra.mrb[0].mxu0 %v1585
    %v1686 = vpop.f32.mrb[0].mxu0
    %v1687 = vadd.f32 %v1526, %v1686
    %v1688 = vpop.f32.mrb[0].mxu0
    %1689 = vmatprep.mubr.f32.mxu0 0.0
    %1690 = vmatmul.mubr.f32.gmra.mrb[0].mxu0 %v1588
    %v1691 = vpop.f32.mrb[0].mxu0
    %v1692 = vadd.f32 %v1531, %v1691
    %v1693 = vpop.f32.mrb[0].mxu0
    %1694 = vmatprep.mubr.f32.mxu0 0.0
    %1695 = vmatmul.mubr.f32.gmra.mrb[0].mxu0 %v1591
    %v1696 = vpop.f32.mrb[0].mxu0
    %v1697 = vadd.f32 %v1536, %v1696
    %v1698 = vpop.f32.mrb[0].mxu0
    %1699 = vmatprep.mubr.f32.mxu0 0.0
    %1700 = vmatmul.mubr.f32.gmra.mrb[0].mxu0 %v1594
    %v1701 = vpop.f32.mrb[0].mxu0
    %v1702 = vadd.f32 %v1541, %v1701
    %v1703 = vpop.f32.mrb[0].mxu0
    %1704 = vmatprep.mubr.f32.mxu0 0.0
    %1705 = vmatmul.mubr.f32.gmra.mrb[0].mxu0 %v1597
    %v1706 = vpop.f32.mrb[0].mxu0
    %v1707 = vadd.f32 %v1546, %v1706
    %v1708 = vpop.f32.mrb[0].mxu0
    %1709 = vmatprep.mubr.f32.mxu0 0.0
    %1710 = vmatmul.mubr.f32.gmra.mrb[0].mxu0 %v1600
    %v1711 = vpop.f32.mrb[0].mxu0
    %v1712 = vadd.f32 %v1551, %v1711
    %v1713 = vpop.f32.mrb[0].mxu0
    %1714 = vmatprep.mubr.f32.mxu0 0.0
    %1715 = vmatmul.mubr.f32.gmra.mrb[0].mxu0 %v1603
    %v1716 = vpop.f32.mrb[0].mxu0
    %v1717 = vadd.f32 %v1556, %v1716
    %v1718 = vpop.f32.mrb[0].mxu0
    %1719 = vmatprep.mubr.f32.mxu0 0.0
    %1720 = vmatmul.mubr.f32.gmra.mrb[0].mxu0 %v1606
    %v1721 = vpop.f32.mrb[0].mxu0
    %v1722 = vadd.f32 %v1561, %v1721
    %v1723 = vpop.f32.mrb[0].mxu0
    %1724 = vmatprep.mubr.f32.mxu0 0.0
    %1725 = vmatmul.mubr.f32.gmra.mrb[0].mxu0 %v1609
    %v1726 = vpop.f32.mrb[0].mxu0
    %v1727 = vadd.f32 %v1566, %v1726
    %v1728 = vpop.f32.mrb[0].mxu0
    %1729 = vmatprep.mubr.f32.mxu0 0.0
    %1730 = vmatmul.mubr.f32.gmra.mrb[0].mxu0 %v1612
    %v1731 = vpop.f32.mrb[0].mxu0
    %v1732 = vadd.f32 %v1571, %v1731
    %v1733 = vpop.f32.mrb[0].mxu0
    %1734 = vmatprep.mubr.f32.mxu0 0.0
    %1735 = vmatmul.mubr.f32.gmra.mrb[0].mxu0 %v1615
    %v1736 = vpop.f32.mrb[0].mxu0
    %v1737 = vadd.f32 %v1576, %v1736
    %v1738 = vpop.f32.mrb[0].mxu0
    %1739 = vmatprep.mubr.f32.mxu0 0.0
    %1740 = vmatmul.mubr.f32.gmra.mrb[0].mxu0 %v1618
    %v1741 = vpop.f32.mrb[0].mxu0
    %v1742 = vadd.f32 %v1581, %v1741
    %v1743 = vpop.f32.mrb[0].mxu0
    %1744 = vdwg.mxu0
    %v1745 = vld [vmem:[%s12 + $0x4] sm:$0x1]
    %v1746 = vlaneseq
    %v1747 = vshrl.u32 %v1746, 7
    %v1748 = vsub.s32 0, %v1747
    %v1749 = vrot.slane %v1745, %v1748
    %v1750 = vadd.f32 %v1687, %v1749
    %v1751 = vadd.f32 %v1692, %v1749
    %v1752 = vadd.f32 %v1697, %v1749
    %v1753 = vadd.f32 %v1702, %v1749
    %v1754 = vadd.f32 %v1707, %v1749
    %v1755 = vadd.f32 %v1712, %v1749
    %v1756 = vadd.f32 %v1717, %v1749
    %v1757 = vadd.f32 %v1722, %v1749
    %v1758 = vadd.f32 %v1727, %v1749
    %v1759 = vadd.f32 %v1732, %v1749
    %v1760 = vadd.f32 %v1737, %v1749
    %v1761 = vadd.f32 %v1742, %v1749
    %v1762 = vpack.c.bf16 %v1751, %v1750
    %v1763 = vpack.c.bf16 %v1753, %v1752
    %v1764 = vpack.c.bf16 %v1755, %v1754
    %v1765 = vpack.c.bf16 %v1757, %v1756
    %v1766 = vpack.c.bf16 %v1759, %v1758
    %v1767 = vpack.c.bf16 %v1761, %v1760
    %1768 = vst.msk [vmem:[#allocation2] sm:$0xff] %vm1175, %v1762
    %1769 = vst.msk [vmem:[#allocation2 + $0x8] sm:$0xff] %vm1175, %v1763
    %1770 = vst.msk [vmem:[#allocation2 + $0x10] sm:$0xff] %vm1175, %v1764
    %1771 = vst.msk [vmem:[#allocation2 + $0x18] sm:$0xff] %vm1175, %v1765
    %1772 = vst.msk [vmem:[#allocation2 + $0x20] sm:$0xff] %vm1175, %v1766
    %1773 = vst.msk [vmem:[#allocation2 + $0x28] sm:$0xff] %vm1175, %v1767
    %vm1774 = vcmask 269568
    %1775 = vst.msk [vmem:[#allocation2] sm:$0xff] %vm1774, 1065369472
    %1776 = vst.msk [vmem:[#allocation2 + $0x8] sm:$0xff] %vm1774, 1065369472
    %1777 = vst.msk [vmem:[#allocation2 + $0x10] sm:$0xff] %vm1774, 1065369472
    %1778 = vst.msk [vmem:[#allocation2 + $0x18] sm:$0xff] %vm1774, 1065369472
    %1779 = vst.msk [vmem:[#allocation2 + $0x20] sm:$0xff] %vm1774, 1065369472
    %1780 = vst.msk [vmem:[#allocation2 + $0x28] sm:$0xff] %vm1774, 1065369472
    %vm1781 = vcmask 7168
    %1782 = vst.msk [vmem:[#allocation3] sm:$0xff] %vm1781, 0.0
    %1783 = vst.msk [vmem:[#allocation3 + $0x8] sm:$0xff] %vm1781, 0.0
    %1784 = vst.msk [vmem:[#allocation3 + $0x10] sm:$0xff] %vm1781, 0.0
    %1785 = vst.msk [vmem:[#allocation3 + $0x18] sm:$0xff] %vm1781, 0.0
    %1786 = vst.msk [vmem:[#allocation3 + $0x20] sm:$0xff] %vm1781, 0.0
    %1787 = vst.msk [vmem:[%s13] sm:$0xff] %vm1175, 0.0
    %1788 = vst.msk [vmem:[%s13 + $0x8] sm:$0xff] %vm1175, 0.0
    %1789 = vst.msk [vmem:[%s13 + $0x10] sm:$0xff] %vm1175, 0.0
    %1790 = vst.msk [vmem:[%s13 + $0x18] sm:$0xff] %vm1175, 0.0
    %1791 = vst.msk [vmem:[%s13 + $0x20] sm:$0xff] %vm1175, 0.0
  $region57: #{tpu_custom_call.1} parent=0 // pred_fallthru
    _
  %v1792 = vlaneseq
  %v1793 = vand.u32 %v1792, 127
  %v1794 = vld [vmem:[%s3] sm:$0xff]
  %v1795 = vld [vmem:[%s3 + $0x8] sm:$0xff]
  %v1796 = vld [vmem:[%s3 + $0x10] sm:$0xff]
  %v1797 = vld [vmem:[%s3 + $0x18] sm:$0xff]
  %v1798 = vld [vmem:[%s3 + $0x20] sm:$0xff]
  %v1799 = vld [vmem:[%s3 + $0x28] sm:$0xff]
  %v1800 = vld [vmem:[%s3 + $0x30] sm:$0xff]
  %v1801 = vld [vmem:[%s3 + $0x38] sm:$0xff]
  %v1802 = vld [vmem:[%s3 + $0x40] sm:$0xff]
  %v1803 = vld [vmem:[%s3 + $0x48] sm:$0xff]
  %v1804 = vld [vmem:[%s3 + $0x50] sm:$0xff]
  %v1805 = vld [vmem:[%s3 + $0x58] sm:$0xff]
  %v1806 = vld [vmem:[%s3 + $0x60] sm:$0xff]
  %v1807 = vld [vmem:[%s3 + $0x68] sm:$0xff]
  %v1808 = vld [vmem:[%s3 + $0x70] sm:$0xff]
  %v1809 = vld [vmem:[%s3 + $0x78] sm:$0xff]
  %1810 = vset.pattern.permute.xlu0 0
  %1811 = vperm.xlu0 %1810, %v1794
  %v1812 = vpop.permute.xlu0 %1811
  %1813 = vset.pattern.permute.xlu0 0
  %1814 = vperm.xlu0 %1813, %v1795
  %v1815 = vpop.permute.xlu0 %1814
  %1816 = vset.pattern.permute.xlu0 0
  %1817 = vperm.xlu0 %1816, %v1796
  %v1818 = vpop.permute.xlu0 %1817
  %1819 = vset.pattern.permute.xlu0 0
  %1820 = vperm.xlu0 %1819, %v1797
  %v1821 = vpop.permute.xlu0 %1820
  %1822 = vset.pattern.permute.xlu0 0
  %1823 = vperm.xlu0 %1822, %v1798
  %v1824 = vpop.permute.xlu0 %1823
  %1825 = vset.pattern.permute.xlu0 0
  %1826 = vperm.xlu0 %1825, %v1799
  %v1827 = vpop.permute.xlu0 %1826
  %1828 = vset.pattern.permute.xlu0 0
  %1829 = vperm.xlu0 %1828, %v1800
  %v1830 = vpop.permute.xlu0 %1829
  %1831 = vset.pattern.permute.xlu0 0
  %1832 = vperm.xlu0 %1831, %v1801
  %v1833 = vpop.permute.xlu0 %1832
  %1834 = vset.pattern.permute.xlu0 0
  %1835 = vperm.xlu0 %1834, %v1802
  %v1836 = vpop.permute.xlu0 %1835
  %1837 = vset.pattern.permute.xlu0 0
  %1838 = vperm.xlu0 %1837, %v1803
  %v1839 = vpop.permute.xlu0 %1838
  %1840 = vset.pattern.permute.xlu0 0
  %1841 = vperm.xlu0 %1840, %v1804
  %v1842 = vpop.permute.xlu0 %1841
  %1843 = vset.pattern.permute.xlu0 0
  %1844 = vperm.xlu0 %1843, %v1805
  %v1845 = vpop.permute.xlu0 %1844
  %1846 = vset.pattern.permute.xlu0 0
  %1847 = vperm.xlu0 %1846, %v1806
  %v1848 = vpop.permute.xlu0 %1847
  %1849 = vset.pattern.permute.xlu0 0
  %1850 = vperm.xlu0 %1849, %v1807
  %v1851 = vpop.permute.xlu0 %1850
  %1852 = vset.pattern.permute.xlu0 0
  %1853 = vperm.xlu0 %1852, %v1808
  %v1854 = vpop.permute.xlu0 %1853
  %1855 = vset.pattern.permute.xlu0 0
  %1856 = vperm.xlu0 %1855, %v1809
  %v1857 = vpop.permute.xlu0 %1856
  %vm1858 = vcmp.eq.s32.totalorder %v1793, %v1812
  %vm1859 = vcmp.eq.s32.totalorder %v1793, %v1815
  %vm1860 = vcmp.eq.s32.totalorder %v1793, %v1818
  %vm1861 = vcmp.eq.s32.totalorder %v1793, %v1821
  %vm1862 = vcmp.eq.s32.totalorder %v1793, %v1824
  %vm1863 = vcmp.eq.s32.totalorder %v1793, %v1827
  %vm1864 = vcmp.eq.s32.totalorder %v1793, %v1830
  %vm1865 = vcmp.eq.s32.totalorder %v1793, %v1833
  %vm1866 = vcmp.eq.s32.totalorder %v1793, %v1836
  %vm1867 = vcmp.eq.s32.totalorder %v1793, %v1839
  %vm1868 = vcmp.eq.s32.totalorder %v1793, %v1842
  %vm1869 = vcmp.eq.s32.totalorder %v1793, %v1845
  %vm1870 = vcmp.eq.s32.totalorder %v1793, %v1848
  %vm1871 = vcmp.eq.s32.totalorder %v1793, %v1851
  %vm1872 = vcmp.eq.s32.totalorder %v1793, %v1854
  %vm1873 = vcmp.eq.s32.totalorder %v1793, %v1857
  %v1874 = vsel %vm1858, 1, 0
  %v1875 = vsel %vm1859, 1, 0
  %v1876 = vsel %vm1860, 1, 0
  %v1877 = vsel %vm1861, 1, 0
  %v1878 = vsel %vm1862, 1, 0
  %v1879 = vsel %vm1863, 1, 0
  %v1880 = vsel %vm1864, 1, 0
  %v1881 = vsel %vm1865, 1, 0
  %v1882 = vsel %vm1866, 1, 0
  %v1883 = vsel %vm1867, 1, 0
  %v1884 = vsel %vm1868, 1, 0
  %v1885 = vsel %vm1869, 1, 0
  %v1886 = vsel %vm1870, 1, 0
  %v1887 = vsel %vm1871, 1, 0
  %v1888 = vsel %vm1872, 1, 0
  %v1889 = vsel %vm1873, 1, 0
  %v1890 = vcvt.s32.f32 %v1874
  %v1891 = vcvt.s32.f32 %v1875
  %v1892 = vcvt.s32.f32 %v1876
  %v1893 = vcvt.s32.f32 %v1877
  %v1894 = vcvt.s32.f32 %v1878
  %v1895 = vcvt.s32.f32 %v1879
  %v1896 = vcvt.s32.f32 %v1880
  %v1897 = vcvt.s32.f32 %v1881
  %v1898 = vcvt.s32.f32 %v1882
  %v1899 = vcvt.s32.f32 %v1883
  %v1900 = vcvt.s32.f32 %v1884
  %v1901 = vcvt.s32.f32 %v1885
  %v1902 = vcvt.s32.f32 %v1886
  %v1903 = vcvt.s32.f32 %v1887
  %v1904 = vcvt.s32.f32 %v1888
  %v1905 = vcvt.s32.f32 %v1889
  %v1906 = vpack.c.bf16 %v1891, %v1890
  %v1907 = vpack.c.bf16 %v1893, %v1892
  %v1908 = vpack.c.bf16 %v1895, %v1894
  %v1909 = vpack.c.bf16 %v1897, %v1896
  %v1910 = vpack.c.bf16 %v1899, %v1898
  %v1911 = vpack.c.bf16 %v1901, %v1900
  %v1912 = vpack.c.bf16 %v1903, %v1902
  %v1913 = vpack.c.bf16 %v1905, %v1904
  %v1914 = vld [vmem:[#allocation2] sm:$0xff]
  %v1915 = vld [vmem:[#allocation2 + $0x8] sm:$0xff]
  %v1916 = vld [vmem:[#allocation2 + $0x10] sm:$0xff]
  %v1917 = vld [vmem:[#allocation2 + $0x18] sm:$0xff]
  %v1918 = vld [vmem:[#allocation2 + $0x20] sm:$0xff]
  %v1919 = vld [vmem:[#allocation2 + $0x28] sm:$0xff]
  %vm1920 = vcmask 785408
  %v1922 = vsel %vm1920, %v1906, 0
  %v1925 = vsel %vm1920, %v1907, 0
  %v1928 = vsel %vm1920, %v1908, 0
  %v1931 = vsel %vm1920, %v1909, 0
  %v1934 = vsel %vm1920, %v1910, 0
  %v1937 = vsel %vm1920, %v1911, 0
  %v1940 = vsel %vm1920, %v1912, 0
  %v1943 = vsel %vm1920, %v1913, 0
  %1945 = vmatprep.subr.bf16.mxu0 0
  %1946 = vmatpush1.bf16.msra.mxu0 %v1914
  %1947 = vmatprep.subr.bf16.mxu0 0
  %1948 = vmatpush1.bf16.msra.mxu0 %v1915
  %1949 = vmatprep.subr.bf16.mxu0 0
  %1950 = vmatpush1.bf16.msra.mxu0 %v1916
  %1951 = vmatprep.subr.bf16.mxu0 0
  %1952 = vmatpush1.bf16.msra.mxu0 %v1917
  %1953 = vmatprep.subr.bf16.mxu0 0
  %1954 = vmatpush1.bf16.msra.mxu0 %v1918
  %1955 = vmatprep.subr.bf16.mxu0 0
  %1956 = vmatpush1.bf16.msra.mxu0 %v1919
  %1957 = vmatprep.subr.bf16.mxu0 0
  %1958 = vmatpush1.bf16.msra.mxu0 0
  %1959 = vmatprep.subr.bf16.mxu0 0
  %1960 = vmatpush1.bf16.msra.mxu0 0
  %1961 = vmatprep.subr.bf16.mxu0 0
  %1962 = vmatpush1.bf16.msra.mxu0 0
  %1963 = vmatprep.subr.bf16.mxu0 0
  %1964 = vmatpush1.bf16.msra.mxu0 0
  %1965 = vmatprep.subr.bf16.mxu0 0
  %1966 = vmatpush1.bf16.msra.mxu0 0
  %1967 = vmatprep.subr.bf16.mxu0 0
  %1968 = vmatpush1.bf16.msra.mxu0 0
  %1969 = vmatprep.subr.bf16.mxu0 0
  %1970 = vmatpush1.bf16.msra.mxu0 0
  %1971 = vmatprep.subr.bf16.mxu0 0
  %1972 = vmatpush1.bf16.msra.mxu0 0
  %1973 = vmatprep.subr.bf16.mxu0 0
  %1974 = vmatpush1.bf16.msra.mxu0 0
  %1975 = vmatprep.subr.bf16.mxu0 0
  %1976 = vmatpush1.bf16.msra.mxu0 0
  %1977 = vmatprep.mubr.bf16.mxu0 0
  %1978 = vmatmul.mubr.bf16.gmra.mrb[0].mxu0 %v1922
  %v1979 = vpop.f32.mrb[0].mxu0
  %v1980 = vadd.f32 0.0, %v1979
  %v1981 = vpop.f32.mrb[0].mxu0
  %v1982 = vpop.f32.mrb[0].mxu0
  %v1983 = vadd.f32 0.0, %v1982
  %v1984 = vpop.f32.mrb[0].mxu0
  %1985 = vmatprep.mubr.bf16.mxu0 0
  %1986 = vmatmul.mubr.bf16.gmra.mrb[0].mxu0 %v1925
  %v1987 = vpop.f32.mrb[0].mxu0
  %v1988 = vadd.f32 0.0, %v1987
  %v1989 = vpop.f32.mrb[0].mxu0
  %v1990 = vpop.f32.mrb[0].mxu0
  %v1991 = vadd.f32 0.0, %v1990
  %v1992 = vpop.f32.mrb[0].mxu0
  %1993 = vmatprep.mubr.bf16.mxu0 0
  %1994 = vmatmul.mubr.bf16.gmra.mrb[0].mxu0 %v1928
  %v1995 = vpop.f32.mrb[0].mxu0
  %v1996 = vadd.f32 0.0, %v1995
  %v1997 = vpop.f32.mrb[0].mxu0
  %v1998 = vpop.f32.mrb[0].mxu0
  %v1999 = vadd.f32 0.0, %v1998
  %v2000 = vpop.f32.mrb[0].mxu0
  %2001 = vmatprep.mubr.bf16.mxu0 0
  %2002 = vmatmul.mubr.bf16.gmra.mrb[0].mxu0 %v1931
  %v2003 = vpop.f32.mrb[0].mxu0
  %v2004 = vadd.f32 0.0, %v2003
  %v2005 = vpop.f32.mrb[0].mxu0
  %v2006 = vpop.f32.mrb[0].mxu0
  %v2007 = vadd.f32 0.0, %v2006
  %v2008 = vpop.f32.mrb[0].mxu0
  %2009 = vmatprep.mubr.bf16.mxu0 0
  %2010 = vmatmul.mubr.bf16.gmra.mrb[0].mxu0 %v1934
  %v2011 = vpop.f32.mrb[0].mxu0
  %v2012 = vadd.f32 0.0, %v2011
  %v2013 = vpop.f32.mrb[0].mxu0
  %v2014 = vpop.f32.mrb[0].mxu0
  %v2015 = vadd.f32 0.0, %v2014
  %v2016 = vpop.f32.mrb[0].mxu0
  %2017 = vmatprep.mubr.bf16.mxu0 0
  %2018 = vmatmul.mubr.bf16.gmra.mrb[0].mxu0 %v1937
  %v2019 = vpop.f32.mrb[0].mxu0
  %v2020 = vadd.f32 0.0, %v2019
  %v2021 = vpop.f32.mrb[0].mxu0
  %v2022 = vpop.f32.mrb[0].mxu0
  %v2023 = vadd.f32 0.0, %v2022
  %v2024 = vpop.f32.mrb[0].mxu0
  %2025 = vmatprep.mubr.bf16.mxu0 0
  %2026 = vmatmul.mubr.bf16.gmra.mrb[0].mxu0 %v1940
  %v2027 = vpop.f32.mrb[0].mxu0
  %v2028 = vadd.f32 0.0, %v2027
  %v2029 = vpop.f32.mrb[0].mxu0
  %v2030 = vpop.f32.mrb[0].mxu0
  %v2031 = vadd.f32 0.0, %v2030
  %v2032 = vpop.f32.mrb[0].mxu0
  %2033 = vmatprep.mubr.bf16.mxu0 0
  %2034 = vmatmul.mubr.bf16.gmra.mrb[0].mxu0 %v1943
  %v2035 = vpop.f32.mrb[0].mxu0
  %v2036 = vadd.f32 0.0, %v2035
  %v2037 = vpop.f32.mrb[0].mxu0
  %v2038 = vpop.f32.mrb[0].mxu0
  %v2039 = vadd.f32 0.0, %v2038
  %v2040 = vpop.f32.mrb[0].mxu0
  %2041 = vdwg.mxu0
  %vm2042 = vcmp.ge.f32.partialorder %v1980, 0.0
  %vm2043 = vcmp.ge.f32.partialorder %v1983, 0.0
  %vm2044 = vcmp.ge.f32.partialorder %v1988, 0.0
  %vm2045 = vcmp.ge.f32.partialorder %v1991, 0.0
  %vm2046 = vcmp.ge.f32.partialorder %v1996, 0.0
  %vm2047 = vcmp.ge.f32.partialorder %v1999, 0.0
  %vm2048 = vcmp.ge.f32.partialorder %v2004, 0.0
  %vm2049 = vcmp.ge.f32.partialorder %v2007, 0.0
  %vm2050 = vcmp.ge.f32.partialorder %v2012, 0.0
  %vm2051 = vcmp.ge.f32.partialorder %v2015, 0.0
  %vm2052 = vcmp.ge.f32.partialorder %v2020, 0.0
  %vm2053 = vcmp.ge.f32.partialorder %v2023, 0.0
  %vm2054 = vcmp.ge.f32.partialorder %v2028, 0.0
  %vm2055 = vcmp.ge.f32.partialorder %v2031, 0.0
  %vm2056 = vcmp.ge.f32.partialorder %v2036, 0.0
  %vm2057 = vcmp.ge.f32.partialorder %v2039, 0.0
  %v2058 = vmul.f32 %v1980, 0.1
  %v2059 = vmul.f32 %v1983, 0.1
  %v2060 = vmul.f32 %v1988, 0.1
  %v2061 = vmul.f32 %v1991, 0.1
  %v2062 = vmul.f32 %v1996, 0.1
  %v2063 = vmul.f32 %v1999, 0.1
  %v2064 = vmul.f32 %v2004, 0.1
  %v2065 = vmul.f32 %v2007, 0.1
  %v2066 = vmul.f32 %v2012, 0.1
  %v2067 = vmul.f32 %v2015, 0.1
  %v2068 = vmul.f32 %v2020, 0.1
  %v2069 = vmul.f32 %v2023, 0.1
  %v2070 = vmul.f32 %v2028, 0.1
  %v2071 = vmul.f32 %v2031, 0.1
  %v2072 = vmul.f32 %v2036, 0.1
  %v2073 = vmul.f32 %v2039, 0.1
  %v2074 = vsel %vm2042, %v1980, %v2058
  %v2075 = vsel %vm2043, %v1983, %v2059
  %v2076 = vsel %vm2044, %v1988, %v2060
  %v2077 = vsel %vm2045, %v1991, %v2061
  %v2078 = vsel %vm2046, %v1996, %v2062
  %v2079 = vsel %vm2047, %v1999, %v2063
  %v2080 = vsel %vm2048, %v2004, %v2064
  %v2081 = vsel %vm2049, %v2007, %v2065
  %v2082 = vsel %vm2050, %v2012, %v2066
  %v2083 = vsel %vm2051, %v2015, %v2067
  %v2084 = vsel %vm2052, %v2020, %v2068
  %v2085 = vsel %vm2053, %v2023, %v2069
  %v2086 = vsel %vm2054, %v2028, %v2070
  %v2087 = vsel %vm2055, %v2031, %v2071
  %v2088 = vsel %vm2056, %v2036, %v2072
  %v2089 = vsel %vm2057, %v2039, %v2073
  %v2090 = vld [vmem:[%s11] sm:$0xff]
  %v2091 = vld [vmem:[%s11 + $0x8] sm:$0xff]
  %v2092 = vld [vmem:[%s11 + $0x10] sm:$0xff]
  %v2093 = vld [vmem:[%s11 + $0x18] sm:$0xff]
  %v2094 = vld [vmem:[%s11 + $0x20] sm:$0x1]
  %vm2095 = vcmask 269312
  %v2097 = vsel %vm2095, %v2074, 0
  %v2100 = vsel %vm2095, %v2075, 0
  %v2103 = vsel %vm2095, %v2076, 0
  %v2106 = vsel %vm2095, %v2077, 0
  %v2109 = vsel %vm2095, %v2078, 0
  %v2112 = vsel %vm2095, %v2079, 0
  %v2115 = vsel %vm2095, %v2080, 0
  %v2118 = vsel %vm2095, %v2081, 0
  %v2121 = vsel %vm2095, %v2082, 0
  %v2124 = vsel %vm2095, %v2083, 0
  %v2127 = vsel %vm2095, %v2084, 0
  %v2130 = vsel %vm2095, %v2085, 0
  %v2133 = vsel %vm2095, %v2086, 0
  %v2136 = vsel %vm2095, %v2087, 0
  %v2139 = vsel %vm2095, %v2088, 0
  %v2142 = vsel %vm2095, %v2089, 0
  %vm2144 = vcmask 1040384
  %v2146 = vsel %vm2144, %v2094, 0
  %2148 = vmatprep.subr.mxu0 0.0
  %2149 = vmatpush1.msra.mxu0 %v2090
  %2150 = vmatprep.subr.mxu0 0.0
  %2151 = vmatpush1.msra.mxu0 %v2091
  %2152 = vmatprep.subr.mxu0 0.0
  %2153 = vmatpush1.msra.mxu0 %v2092
  %2154 = vmatprep.subr.mxu0 0.0
  %2155 = vmatpush1.msra.mxu0 %v2093
  %2156 = vmatprep.subr.mxu0 0.0
  %2157 = vmatpush1.msra.mxu0 %v2146
  %2158 = vmatprep.subr.mxu0 0.0
  %2159 = vmatpush1.msra.mxu0 0.0
  %2160 = vmatprep.subr.mxu0 0.0
  %2161 = vmatpush1.msra.mxu0 0.0
  %2162 = vmatprep.subr.mxu0 0.0
  %2163 = vmatpush1.msra.mxu0 0.0
  %2164 = vmatprep.subr.mxu0 0.0
  %2165 = vmatpush1.msra.mxu0 0.0
  %2166 = vmatprep.subr.mxu0 0.0
  %2167 = vmatpush1.msra.mxu0 0.0
  %2168 = vmatprep.subr.mxu0 0.0
  %2169 = vmatpush1.msra.mxu0 0.0
  %2170 = vmatprep.subr.mxu0 0.0
  %2171 = vmatpush1.msra.mxu0 0.0
  %2172 = vmatprep.subr.mxu0 0.0
  %2173 = vmatpush1.msra.mxu0 0.0
  %2174 = vmatprep.subr.mxu0 0.0
  %2175 = vmatpush1.msra.mxu0 0.0
  %2176 = vmatprep.subr.mxu0 0.0
  %2177 = vmatpush1.msra.mxu0 0.0
  %2178 = vmatprep.subr.mxu0 0.0
  %2179 = vmatpush1.msra.mxu0 0.0
  %2180 = vmatprep.subr.mxu0 0.0
  %2181 = vmatpush1.msra.mxu0 0.0
  %2182 = vmatprep.subr.mxu0 0.0
  %2183 = vmatpush1.msra.mxu0 0.0
  %2184 = vmatprep.subr.mxu0 0.0
  %2185 = vmatpush1.msra.mxu0 0.0
  %2186 = vmatprep.subr.mxu0 0.0
  %2187 = vmatpush1.msra.mxu0 0.0
  %2188 = vmatprep.subr.mxu0 0.0
  %2189 = vmatpush1.msra.mxu0 0.0
  %2190 = vmatprep.subr.mxu0 0.0
  %2191 = vmatpush1.msra.mxu0 0.0
  %2192 = vmatprep.subr.mxu0 0.0
  %2193 = vmatpush1.msra.mxu0 0.0
  %2194 = vmatprep.subr.mxu0 0.0
  %2195 = vmatpush1.msra.mxu0 0.0
  %2196 = vmatprep.subr.mxu0 0.0
  %2197 = vmatpush1.msra.mxu0 0.0
  %2198 = vmatprep.subr.mxu0 0.0
  %2199 = vmatpush1.msra.mxu0 0.0
  %2200 = vmatprep.subr.mxu0 0.0
  %2201 = vmatpush1.msra.mxu0 0.0
  %2202 = vmatprep.subr.mxu0 0.0
  %2203 = vmatpush1.msra.mxu0 0.0
  %2204 = vmatprep.subr.mxu0 0.0
  %2205 = vmatpush1.msra.mxu0 0.0
  %2206 = vmatprep.subr.mxu0 0.0
  %2207 = vmatpush1.msra.mxu0 0.0
  %2208 = vmatprep.subr.mxu0 0.0
  %2209 = vmatpush1.msra.mxu0 0.0
  %2210 = vmatprep.subr.mxu0 0.0
  %2211 = vmatpush1.msra.mxu0 0.0
  %2212 = vmatprep.mubr.f32.mxu0 0.0
  %2213 = vmatmul.mubr.f32.gmra.mrb[0].mxu0 %v2097
  %v2214 = vpop.f32.mrb[0].mxu0
  %v2215 = vadd.f32 0.0, %v2214
  %v2216 = vpop.f32.mrb[0].mxu0
  %2217 = vmatprep.mubr.f32.mxu0 0.0
  %2218 = vmatmul.mubr.f32.gmra.mrb[0].mxu0 %v2100
  %v2219 = vpop.f32.mrb[0].mxu0
  %v2220 = vadd.f32 0.0, %v2219
  %v2221 = vpop.f32.mrb[0].mxu0
  %2222 = vmatprep.mubr.f32.mxu0 0.0
  %2223 = vmatmul.mubr.f32.gmra.mrb[0].mxu0 %v2103
  %v2224 = vpop.f32.mrb[0].mxu0
  %v2225 = vadd.f32 0.0, %v2224
  %v2226 = vpop.f32.mrb[0].mxu0
  %2227 = vmatprep.mubr.f32.mxu0 0.0
  %2228 = vmatmul.mubr.f32.gmra.mrb[0].mxu0 %v2106
  %v2229 = vpop.f32.mrb[0].mxu0
  %v2230 = vadd.f32 0.0, %v2229
  %v2231 = vpop.f32.mrb[0].mxu0
  %2232 = vmatprep.mubr.f32.mxu0 0.0
  %2233 = vmatmul.mubr.f32.gmra.mrb[0].mxu0 %v2109
  %v2234 = vpop.f32.mrb[0].mxu0
  %v2235 = vadd.f32 0.0, %v2234
  %v2236 = vpop.f32.mrb[0].mxu0
  %2237 = vmatprep.mubr.f32.mxu0 0.0
  %2238 = vmatmul.mubr.f32.gmra.mrb[0].mxu0 %v2112
  %v2239 = vpop.f32.mrb[0].mxu0
  %v2240 = vadd.f32 0.0, %v2239
  %v2241 = vpop.f32.mrb[0].mxu0
  %2242 = vmatprep.mubr.f32.mxu0 0.0
  %2243 = vmatmul.mubr.f32.gmra.mrb[0].mxu0 %v2115
  %v2244 = vpop.f32.mrb[0].mxu0
  %v2245 = vadd.f32 0.0, %v2244
  %v2246 = vpop.f32.mrb[0].mxu0
  %2247 = vmatprep.mubr.f32.mxu0 0.0
  %2248 = vmatmul.mubr.f32.gmra.mrb[0].mxu0 %v2118
  %v2249 = vpop.f32.mrb[0].mxu0
  %v2250 = vadd.f32 0.0, %v2249
  %v2251 = vpop.f32.mrb[0].mxu0
  %2252 = vmatprep.mubr.f32.mxu0 0.0
  %2253 = vmatmul.mubr.f32.gmra.mrb[0].mxu0 %v2121
  %v2254 = vpop.f32.mrb[0].mxu0
  %v2255 = vadd.f32 0.0, %v2254
  %v2256 = vpop.f32.mrb[0].mxu0
  %2257 = vmatprep.mubr.f32.mxu0 0.0
  %2258 = vmatmul.mubr.f32.gmra.mrb[0].mxu0 %v2124
  %v2259 = vpop.f32.mrb[0].mxu0
  %v2260 = vadd.f32 0.0, %v2259
  %v2261 = vpop.f32.mrb[0].mxu0
  %2262 = vmatprep.mubr.f32.mxu0 0.0
  %2263 = vmatmul.mubr.f32.gmra.mrb[0].mxu0 %v2127
  %v2264 = vpop.f32.mrb[0].mxu0
  %v2265 = vadd.f32 0.0, %v2264
  %v2266 = vpop.f32.mrb[0].mxu0
  %2267 = vmatprep.mubr.f32.mxu0 0.0
  %2268 = vmatmul.mubr.f32.gmra.mrb[0].mxu0 %v2130
  %v2269 = vpop.f32.mrb[0].mxu0
  %v2270 = vadd.f32 0.0, %v2269
  %v2271 = vpop.f32.mrb[0].mxu0
  %2272 = vmatprep.mubr.f32.mxu0 0.0
  %2273 = vmatmul.mubr.f32.gmra.mrb[0].mxu0 %v2133
  %v2274 = vpop.f32.mrb[0].mxu0
  %v2275 = vadd.f32 0.0, %v2274
  %v2276 = vpop.f32.mrb[0].mxu0
  %2277 = vmatprep.mubr.f32.mxu0 0.0
  %2278 = vmatmul.mubr.f32.gmra.mrb[0].mxu0 %v2136
  %v2279 = vpop.f32.mrb[0].mxu0
  %v2280 = vadd.f32 0.0, %v2279
  %v2281 = vpop.f32.mrb[0].mxu0
  %2282 = vmatprep.mubr.f32.mxu0 0.0
  %2283 = vmatmul.mubr.f32.gmra.mrb[0].mxu0 %v2139
  %v2284 = vpop.f32.mrb[0].mxu0
  %v2285 = vadd.f32 0.0, %v2284
  %v2286 = vpop.f32.mrb[0].mxu0
  %2287 = vmatprep.mubr.f32.mxu0 0.0
  %2288 = vmatmul.mubr.f32.gmra.mrb[0].mxu0 %v2142
  %v2289 = vpop.f32.mrb[0].mxu0
  %v2290 = vadd.f32 0.0, %v2289
  %v2291 = vpop.f32.mrb[0].mxu0
  %2292 = vdwg.mxu0
  %v2293 = vlaneseq
  %v2294 = vshrl.u32 %v2293, 7
  %v2295 = vadd.s32 %v2294, 8
  %v2296 = vadd.s32 %v2294, 16
  %v2297 = vadd.s32 %v2294, 24
  %v2298 = vadd.s32 %v2294, 32
  %v2299 = vld [vmem:[%s4] sm:$0x1]
  %v2300 = vlaneseq
  %v2301 = vshrl.u32 %v2300, 7
  %v2302 = vsub.s32 0, %v2301
  %v2303 = vrot.slane %v2299, %v2302
  %vm2304 = vcmp.eq.s32.totalorder %v2294, %v2303
  %vm2305 = vcmp.eq.s32.totalorder %v2295, %v2303
  %vm2306 = vcmp.eq.s32.totalorder %v2296, %v2303
  %vm2307 = vcmp.eq.s32.totalorder %v2297, %v2303
  %vm2308 = vcmp.eq.s32.totalorder %v2298, %v2303
  %v2309 = vsel %vm2304, 1, 0
  %v2310 = vsel %vm2305, 1, 0
  %v2311 = vsel %vm2306, 1, 0
  %v2312 = vsel %vm2307, 1, 0
  %v2313 = vsel %vm2308, 1, 0
  %v2314 = vcvt.s32.f32 %v2309
  %v2315 = vcvt.s32.f32 %v2310
  %v2316 = vcvt.s32.f32 %v2311
  %v2317 = vcvt.s32.f32 %v2312
  %v2318 = vcvt.s32.f32 %v2313
  %v2319 = vpack.c.bf16 %v2315, %v2314
  %v2320 = vpack.c.bf16 %v2317, %v2316
  %v2321 = vpack.c.bf16 %v2318, %v2318
  %v2322 = vpack.c.bf16 %v2220, %v2215
  %v2323 = vpack.c.bf16 %v2230, %v2225
  %v2324 = vpack.c.bf16 %v2240, %v2235
  %v2325 = vpack.c.bf16 %v2250, %v2245
  %v2326 = vpack.c.bf16 %v2260, %v2255
  %v2327 = vpack.c.bf16 %v2270, %v2265
  %v2328 = vpack.c.bf16 %v2280, %v2275
  %v2329 = vpack.c.bf16 %v2290, %v2285
  %2330 = vmatprep.subr.bf16.mxu0 0
  %2331 = vmatpush1.bf16.msra.mxu0 %v2322
  %2332 = vmatprep.subr.bf16.mxu0 0
  %2333 = vmatpush1.bf16.msra.mxu0 %v2323
  %2334 = vmatprep.subr.bf16.mxu0 0
  %2335 = vmatpush1.bf16.msra.mxu0 %v2324
  %2336 = vmatprep.subr.bf16.mxu0 0
  %2337 = vmatpush1.bf16.msra.mxu0 %v2325
  %2338 = vmatprep.subr.bf16.mxu0 0
  %2339 = vmatpush1.bf16.msra.mxu0 %v2326
  %2340 = vmatprep.subr.bf16.mxu0 0
  %2341 = vmatpush1.bf16.msra.mxu0 %v2327
  %2342 = vmatprep.subr.bf16.mxu0 0
  %2343 = vmatpush1.bf16.msra.mxu0 %v2328
  %2344 = vmatprep.subr.bf16.mxu0 0
  %2345 = vmatpush1.bf16.msra.mxu0 %v2329
  %2346 = vmatprep.subr.bf16.mxu0 0
  %2347 = vmatpush1.bf16.msra.mxu0 0
  %2348 = vmatprep.subr.bf16.mxu0 0
  %2349 = vmatpush1.bf16.msra.mxu0 0
  %2350 = vmatprep.subr.bf16.mxu0 0
  %2351 = vmatpush1.bf16.msra.mxu0 0
  %2352 = vmatprep.subr.bf16.mxu0 0
  %2353 = vmatpush1.bf16.msra.mxu0 0
  %2354 = vmatprep.subr.bf16.mxu0 0
  %2355 = vmatpush1.bf16.msra.mxu0 0
  %2356 = vmatprep.subr.bf16.mxu0 0
  %2357 = vmatpush1.bf16.msra.mxu0 0
  %2358 = vmatprep.subr.bf16.mxu0 0
  %2359 = vmatpush1.bf16.msra.mxu0 0
  %2360 = vmatprep.subr.bf16.mxu0 0
  %2361 = vmatpush1.bf16.msra.mxu0 0
  %2362 = vmatprep.mubr.bf16.mxu0 0
  %2363 = vmatmul.mubr.bf16.gmra.mrb[0].mxu0 %v2319
  %v2364 = vpop.f32.mrb[0].mxu0
  %v2365 = vadd.f32 0.0, %v2364
  %v2366 = vpop.f32.mrb[0].mxu0
  %v2367 = vpop.f32.mrb[0].mxu0
  %v2368 = vadd.f32 0.0, %v2367
  %v2369 = vpop.f32.mrb[0].mxu0
  %2370 = vmatprep.mubr.bf16.mxu0 0
  %2371 = vmatmul.mubr.bf16.gmra.mrb[0].mxu0 %v2320
  %v2372 = vpop.f32.mrb[0].mxu0
  %v2373 = vadd.f32 0.0, %v2372
  %v2374 = vpop.f32.mrb[0].mxu0
  %v2375 = vpop.f32.mrb[0].mxu0
  %v2376 = vadd.f32 0.0, %v2375
  %v2377 = vpop.f32.mrb[0].mxu0
  %2378 = vmatprep.mubr.bf16.mxu0 0
  %2379 = vmatmul.mubr.bf16.gmra.mrb[0].mxu0 %v2321
  %v2380 = vpop.f32.mrb[0].mxu0
  %v2381 = vadd.f32 0.0, %v2380
  %v2382 = vpop.f32.mrb[0].mxu0
  %v2383 = vpop.f32.mrb[0].mxu0
  %v2384 = vpop.f32.mrb[0].mxu0
  %2385 = vdwg.mxu0
  %v2386 = vld [vmem:[%s13] sm:$0xff]
  %v2387 = vld [vmem:[%s13 + $0x8] sm:$0xff]
  %v2388 = vld [vmem:[%s13 + $0x10] sm:$0xff]
  %v2389 = vld [vmem:[%s13 + $0x18] sm:$0xff]
  %v2390 = vld [vmem:[%s13 + $0x20] sm:$0xff]
  %v2391 = vadd.f32 %v2386, %v2365
  %v2392 = vadd.f32 %v2387, %v2368
  %v2393 = vadd.f32 %v2388, %v2373
  %v2394 = vadd.f32 %v2389, %v2376
  %v2395 = vadd.f32 %v2390, %v2381
  %vm2396 = vcmask 261120
  %2397 = vst.msk [vmem:[%s13] sm:$0xff] %vm2396, %v2391
  %2398 = vst.msk [vmem:[%s13 + $0x8] sm:$0xff] %vm2396, %v2392
  %2399 = vst.msk [vmem:[%s13 + $0x10] sm:$0xff] %vm2396, %v2393
  %2400 = vst.msk [vmem:[%s13 + $0x18] sm:$0xff] %vm2396, %v2394
  %2401 = vst.msk [vmem:[%s13 + $0x20] sm:$0xff] %vm2396, %v2395
  %v2402 = vld [vmem:[#allocation3] sm:$0xff]
  %v2403 = vld [vmem:[#allocation3 + $0x8] sm:$0xff]
  %v2404 = vld [vmem:[#allocation3 + $0x10] sm:$0xff]
  %v2405 = vld [vmem:[#allocation3 + $0x18] sm:$0xff]
  %v2406 = vld [vmem:[#allocation3 + $0x20] sm:$0xff]
  %2412 = vrot.lane.b32.xlu0 %v2365, 96
  %v2413 = vpop.permute.xlu0 %2412
  %2414 = vrot.lane.b32.xlu0 %v2368, 96
  %v2415 = vpop.permute.xlu0 %2414
  %2416 = vrot.lane.b32.xlu0 %v2373, 96
  %v2417 = vpop.permute.xlu0 %2416
  %2418 = vrot.lane.b32.xlu0 %v2376, 96
  %v2419 = vpop.permute.xlu0 %2418
  %2420 = vrot.lane.b32.xlu0 %v2381, 96
  %v2421 = vpop.permute.xlu0 %2420
  %v2427 = vadd.f32 %v2402, %v2413
  %v2428 = vadd.f32 %v2403, %v2415
  %v2429 = vadd.f32 %v2404, %v2417
  %v2430 = vadd.f32 %v2405, %v2419
  %v2431 = vadd.f32 %v2406, %v2421
  %vm2432 = vcmask 7168
  %2433 = vst.msk [vmem:[#allocation3] sm:$0xff] %vm2432, %v2427
  %2434 = vst.msk [vmem:[#allocation3 + $0x8] sm:$0xff] %vm2432, %v2428
  %2435 = vst.msk [vmem:[#allocation3 + $0x10] sm:$0xff] %vm2432, %v2429
  %2436 = vst.msk [vmem:[#allocation3 + $0x18] sm:$0xff] %vm2432, %v2430
  %2437 = vst.msk [vmem:[#allocation3 + $0x20] sm:$0xff] %vm2432, %v2431
  // Predicated region
  $region58: #{tpu_custom_call.1} parent=0 // pred_check
    %p2438 = pneg %p46
  $region59: #{tpu_custom_call.1} parent=0 // pred_check_branch
    %2440 = sbr.rel (%p2438) target = $region61
  $region60: #{tpu_custom_call.1} parent=0 // pred_region
    %v2441 = vld [vmem:[#allocation3] sm:$0xff]
    %v2442 = vld [vmem:[#allocation3 + $0x8] sm:$0xff]
    %v2443 = vld [vmem:[#allocation3 + $0x10] sm:$0xff]
    %v2444 = vld [vmem:[#allocation3 + $0x18] sm:$0xff]
    %v2445 = vld [vmem:[#allocation3 + $0x20] sm:$0xff]
    %v2446 = vld [vmem:[%s13] sm:$0xff]
    %v2447 = vld [vmem:[%s13 + $0x8] sm:$0xff]
    %v2448 = vld [vmem:[%s13 + $0x10] sm:$0xff]
    %v2449 = vld [vmem:[%s13 + $0x18] sm:$0xff]
    %v2450 = vld [vmem:[%s13 + $0x20] sm:$0xff]
    %v2451 = vmax.f32 %v2441, 1.0
    %v2452 = vmax.f32 %v2442, 1.0
    %v2453 = vmax.f32 %v2443, 1.0
    %v2454 = vmax.f32 %v2444, 1.0
    %v2455 = vmax.f32 %v2445, 1.0
    %v2456 = vrcp.pop %v2451
    %v2457 = vrcp.pop %v2452
    %v2458 = vrcp.pop %v2453
    %v2459 = vrcp.pop %v2454
    %v2460 = vrcp.pop %v2455
    %2462 = vset.pattern.permute.xlu0 0
    %2463 = vperm.xlu0 %2462, %v2456
    %v2464 = vpop.permute.xlu0 %2463
    %2467 = vset.pattern.permute.xlu0 0
    %2468 = vperm.xlu0 %2467, %v2457
    %v2469 = vpop.permute.xlu0 %2468
    %2472 = vset.pattern.permute.xlu0 0
    %2473 = vperm.xlu0 %2472, %v2458
    %v2474 = vpop.permute.xlu0 %2473
    %2477 = vset.pattern.permute.xlu0 0
    %2478 = vperm.xlu0 %2477, %v2459
    %v2479 = vpop.permute.xlu0 %2478
    %2482 = vset.pattern.permute.xlu0 0
    %2483 = vperm.xlu0 %2482, %v2460
    %v2484 = vpop.permute.xlu0 %2483
    %v2486 = vmul.f32 %v2446, %v2464
    %v2487 = vmul.f32 %v2447, %v2469
    %v2488 = vmul.f32 %v2448, %v2474
    %v2489 = vmul.f32 %v2449, %v2479
    %v2490 = vmul.f32 %v2450, %v2484
    %vm2491 = vcmp.gt.f32.partialorder %v2441, 0.5
    %vm2492 = vcmp.gt.f32.partialorder %v2442, 0.5
    %vm2493 = vcmp.gt.f32.partialorder %v2443, 0.5
    %vm2494 = vcmp.gt.f32.partialorder %v2444, 0.5
    %vm2495 = vcmp.gt.f32.partialorder %v2445, 0.5
    %v2496 = vld [vmem:[%s12 + $0x5] sm:$0x1]
    %v2497 = vsel %vm2491, 1, 0
    %v2498 = vsel %vm2492, 1, 0
    %v2499 = vsel %vm2493, 1, 0
    %v2500 = vsel %vm2494, 1, 0
    %v2501 = vsel %vm2495, 1, 0
    %2502 = vset.pattern.permute.xlu0 0
    %2503 = vperm.xlu0 %2502, %v2497
    %v2504 = vpop.permute.xlu0 %2503
    %2505 = vset.pattern.permute.xlu0 0
    %2506 = vperm.xlu0 %2505, %v2498
    %v2507 = vpop.permute.xlu0 %2506
    %2508 = vset.pattern.permute.xlu0 0
    %2509 = vperm.xlu0 %2508, %v2499
    %v2510 = vpop.permute.xlu0 %2509
    %2511 = vset.pattern.permute.xlu0 0
    %2512 = vperm.xlu0 %2511, %v2500
    %v2513 = vpop.permute.xlu0 %2512
    %2514 = vset.pattern.permute.xlu0 0
    %2515 = vperm.xlu0 %2514, %v2501
    %v2516 = vpop.permute.xlu0 %2515
    %vm2517 = vcmp.eq.s32.totalorder %v2504, 1
    %vm2518 = vcmp.eq.s32.totalorder %v2507, 1
    %vm2519 = vcmp.eq.s32.totalorder %v2510, 1
    %vm2520 = vcmp.eq.s32.totalorder %v2513, 1
    %vm2521 = vcmp.eq.s32.totalorder %v2516, 1
    %v2522 = vlaneseq
    %v2523 = vshrl.u32 %v2522, 7
    %v2524 = vsub.s32 0, %v2523
    %v2525 = vrot.slane %v2496, %v2524
    %v2526 = vsel %vm2517, %v2525, 0.0
    %v2527 = vsel %vm2518, %v2525, 0.0
    %v2528 = vsel %vm2519, %v2525, 0.0
    %v2529 = vsel %vm2520, %v2525, 0.0
    %v2530 = vsel %vm2521, %v2525, 0.0
    %v2531 = vadd.f32 %v2486, %v2526
    %v2532 = vadd.f32 %v2487, %v2527
    %v2533 = vadd.f32 %v2488, %v2528
    %v2534 = vadd.f32 %v2489, %v2529
    %v2535 = vadd.f32 %v2490, %v2530
    %2536 = vst.msk [vmem:[%s13] sm:$0xff] %vm2396, %v2531
    %2537 = vst.msk [vmem:[%s13 + $0x8] sm:$0xff] %vm2396, %v2532
    %2538 = vst.msk [vmem:[%s13 + $0x10] sm:$0xff] %vm2396, %v2533
    %2539 = vst.msk [vmem:[%s13 + $0x18] sm:$0xff] %vm2396, %v2534
    %2540 = vst.msk [vmem:[%s13 + $0x20] sm:$0xff] %vm2396, %v2535
  $region61: #{tpu_custom_call.1} parent=0 // pred_fallthru
    _
  // Predicated region
  $region62: #{tpu_custom_call.1} parent=0 // pred_check
    _
  $region63: #{tpu_custom_call.1} parent=0 // pred_check_branch
    %2542 = sbr.rel (0) target = $region65
  $region64: #{tpu_custom_call.1} parent=0 // pred_region
    _
  $region65: #{tpu_custom_call.1} parent=0 // pred_fallthru
    _
  // Predicated region
  $region66: #{tpu_custom_call.1} parent=0 // pred_check
    _
  $region67: #{tpu_custom_call.1} parent=0 // pred_check_branch
    %2544 = sbr.rel (0) target = $region69
  $region68: #{tpu_custom_call.1} parent=0 // pred_region
    _
  $region69: #{tpu_custom_call.1} parent=0 // pred_fallthru
    _

</llo_original>
